<compile_context>
chip_gen: v7x
topology: tpu7x:2x2x1
jax: 0.10.0
libtpu: 0.0.40
codegen_flags: <defaults>
</compile_context>

<pallas_src>
import math
import functools

import jax
import jax.numpy as jnp
from jax.experimental import pallas as pl
from jax.experimental.pallas import tpu as pltpu


# ----------------------------------------------------------------------------
# Fused kernel: MLP stack (Linear -> LayerNorm -> GELU -> Dropout) + MHA.
# ----------------------------------------------------------------------------
def _deep_processor_kernel(x_ref, *refs, num_layers, num_heads, batch, seq):
    """Fused forward for the whole (tiny, VMEM-resident) problem.

    Ref layout (inputs, then outputs, then scratch):
      x_ref                                  (N*L, Din)   batch folded into rows
      per MLP layer i: w_i, b_i, g_i, beta_i ((in,out), (1,out), (1,out), (1,out))
      wq, wk, wv                             (E, E)   q-scale pre-folded into wq
      bq, bk, bv                             (1, E)   q-scale pre-folded into bq
      wo                                     (E, E)
      bo                                     (1, E)
      out_ref                                (N*L, E)  attention output rows
      attn_ref                               (N, L, L) head-averaged attention weights
      ctx_ref (scratch)                      (N*L, E)  per-head context assembly
    """
    mlp_refs = refs[:4 * num_layers]
    (wq_ref, wk_ref, wv_ref, bq_ref, bk_ref, bv_ref,
     wo_ref, bo_ref, out_ref, attn_ref, ctx_ref) = refs[4 * num_layers:]

    N, L, H = batch, seq, num_heads
    inv_sqrt2 = 1.0 / math.sqrt(2.0)

    # ---- Linear -> LayerNorm(eps=1e-5) -> exact GELU -> Dropout(identity) -------
    # All N*L rows processed at once (single lane-dense matmul per layer).
    f = x_ref[...]                                                  # (N*L, Din)
    for li in range(num_layers):
        w_ref, b_ref, g_ref, be_ref = mlp_refs[4 * li:4 * (li + 1)]
        h = jnp.dot(f, w_ref[...],
                    preferred_element_type=jnp.float32) + b_ref[...]
        mu = jnp.mean(h, axis=-1, keepdims=True)
        var = jnp.mean(jnp.square(h - mu), axis=-1, keepdims=True)
        hn = (h - mu) * jax.lax.rsqrt(var + 1e-5)
        hn = hn * g_ref[...] + be_ref[...]
        f = 0.5 * hn * (1.0 + jax.lax.erf(hn * inv_sqrt2))          # exact (erf) GELU
        # TODO(synk): Dropout(p=0.3) is identity here (eval mode); training-mode
        # RNG masking is not implemented.

    E = f.shape[-1]
    D = E // H

    # ---- Multi-head self-attention ----------------------------------------------
    # Dense (N*L,E)@(E,E) projections; 1/sqrt(D) was folded into wq/bq at prep time.
    q = jnp.dot(f, wq_ref[...], preferred_element_type=jnp.float32) + bq_ref[...]
    k = jnp.dot(f, wk_ref[...], preferred_element_type=jnp.float32) + bk_ref[...]
    v = jnp.dot(f, wv_ref[...], preferred_element_type=jnp.float32) + bv_ref[...]

    q3 = q.reshape(N, L, E)
    k3 = k.reshape(N, L, E)
    v3 = v.reshape(N, L, E)

    inv_heads = 1.0 / H
    p_acc = None
    for hh in range(H):                      # H=4, static: per-head scores/context
        lo, hi = hh * D, (hh + 1) * D
        qh = q3[:, :, lo:hi]                                         # (N, L, D)
        kh = k3[:, :, lo:hi]
        vh = v3[:, :, lo:hi]
        s = jnp.einsum('nld,nmd->nlm', qh, kh,
                       preferred_element_type=jnp.float32)           # (N, L, L)
        s = s - jnp.max(s, axis=-1, keepdims=True)
        p = jnp.exp(s)
        # Exact softmax normalization: attention weights are a returned output.
        p = p / jnp.sum(p, axis=-1, keepdims=True)
        ctx_h = jnp.einsum('nlm,nmd->nld', p, vh,
                           preferred_element_type=jnp.float32)       # (N, L, D)
        # Assemble contexts lane-contiguously so the out-projection is ONE matmul.
        ctx_ref[:, lo:hi] = ctx_h.reshape(N * L, D)
        p_acc = p if p_acc is None else p_acc + p

    # Single lane-dense out-projection: (N*L, E) @ (E, E).
    out_ref[...] = jnp.dot(ctx_ref[...], wo_ref[...],
                           preferred_element_type=jnp.float32) + bo_ref[...]
    # PyTorch default (average_attn_weights=True): head-averaged weights.
    attn_ref[...] = p_acc * inv_heads


# ----------------------------------------------------------------------------
# Parameters (weights stored transposed for right-multiplication: y = x @ W + b)
# ----------------------------------------------------------------------------
def init_params(key, input_dim, hidden_dims, num_heads=4):
    params = {"mlp": [], "attn": {}}
    in_dim = input_dim
    for hd in hidden_dims:
        key, k1, k2 = jax.random.split(key, 3)
        w = jax.random.normal(k1, (in_dim, hd), jnp.float32) / math.sqrt(in_dim)
        b = jax.random.normal(k2, (1, hd), jnp.float32) * 0.01
        g = jnp.ones((1, hd), jnp.float32)       # LayerNorm gamma
        beta = jnp.zeros((1, hd), jnp.float32)   # LayerNorm beta
        params["mlp"].append((w, b, g, beta))
        in_dim = hd
    E = hidden_dims[-1]
    assert E % num_heads == 0
    key, kq, kk, kv, ko = jax.random.split(key, 5)
    # PyTorch packs q/k/v into a (3E, E) in_proj acting as x @ W^T; here we keep the
    # three (E, E) slices already transposed for right-multiplication.
    params["attn"] = dict(
        wq=jax.random.normal(kq, (E, E), jnp.float32) / math.sqrt(E),
        wk=jax.random.normal(kk, (E, E), jnp.float32) / math.sqrt(E),
        wv=jax.random.normal(kv, (E, E), jnp.float32) / math.sqrt(E),
        bq=jnp.zeros((1, E), jnp.float32),
        bk=jnp.zeros((1, E), jnp.float32),
        bv=jnp.zeros((1, E), jnp.float32),
        wo=jax.random.normal(ko, (E, E), jnp.float32) / math.sqrt(E),
        bo=jnp.zeros((1, E), jnp.float32),
    )
    return params


def prepare_params(params, num_heads=4):
    """One-time kernel-layout prep (NOT per-call): fold 1/sqrt(D) into wq/bq,
    flatten the MLP params. Returns (mlp_flat, attn_flat) ready for the kernel."""
    a = params["attn"]
    E = a["wq"].shape[0]
    scale = 1.0 / math.sqrt(E // num_heads)
    mlp_flat = []
    for (w, b, g, beta) in params["mlp"]:
        mlp_flat += [w, b, g, beta]
    attn_flat = (a["wq"] * scale, a["wk"], a["wv"],
                 a["bq"] * scale, a["bk"], a["bv"],
                 a["wo"], a["bo"])
    return tuple(mlp_flat), attn_flat


# ----------------------------------------------------------------------------
# DeepProcessor forward: single fused pallas_call inside one jitted program.
# ----------------------------------------------------------------------------
@functools.partial(jax.jit, static_argnames=("num_heads",))
def deep_processor_forward(x, mlp_flat, attn_flat, *, num_heads=4):
    """x: (L, N, input_dim) -> (attn_output (L, N, E), attn_weights (N, L, L))."""
    L, N, Din = x.shape
    num_layers = len(mlp_flat) // 4
    E = mlp_flat[4 * (num_layers - 1)].shape[1]

    # Fold batch into rows: (L, N, Din) -> (N*L, Din). KB-scale, fuses under jit.
    x_rows = jnp.transpose(x, (1, 0, 2)).reshape(N * L, Din)

    kernel = functools.partial(_deep_processor_kernel,
                               num_layers=num_layers, num_heads=num_heads,
                               batch=N, seq=L)
    out_rows, attn_w = pl.pallas_call(
        kernel,
        out_shape=(
            jax.ShapeDtypeStruct((N * L, E), jnp.float32),
            jax.ShapeDtypeStruct((N, L, L), jnp.float32),
        ),
        # No grid: the whole problem fits in a few KiB of VMEM; a single invocation
        # with default full-array blocks avoids per-step pipeline bookkeeping and
        # HBM round-trips between layers.
        scratch_shapes=[pltpu.VMEM((N * L, E), jnp.float32)],
    )(x_rows, *mlp_flat, *attn_flat)

    attn_out = out_rows.reshape(N, L, E).transpose(1, 0, 2)          # (L, N, E)
    return attn_out, attn_w


if __name__ == "__main__":
    # Small shapes: seq=8, batch=2, input_dim=16, hidden_dims=[32, 32], 4 heads.
    L, N, input_dim = 8, 2, 16
    hidden_dims = [32, 32]
    num_heads = 4

    key = jax.random.PRNGKey(0)
    key, kx = jax.random.split(key)
    x = jax.random.normal(kx, (L, N, input_dim), jnp.float32)

    params = init_params(key, input_dim, hidden_dims, num_heads=num_heads)
    mlp_flat, attn_flat = prepare_params(params, num_heads=num_heads)  # one-time prep

    attn_out, attn_weights = deep_processor_forward(
        x, mlp_flat, attn_flat, num_heads=num_heads)
    jax.block_until_ready((attn_out, attn_weights))

    assert attn_out.shape == (L, N, hidden_dims[-1])
    assert attn_weights.shape == (N, L, L)
    print("KERNEL_OK")
</pallas_src>

<mosaic_0001>
module attributes {stable_mosaic.version = 11 : i64} {
  func.func @_deep_processor_kernel(%arg0: memref<16x16xf32, #tpu.memory_space<vmem>>, %arg1: memref<16x32xf32, #tpu.memory_space<vmem>>, %arg2: memref<1x32xf32, #tpu.memory_space<vmem>>, %arg3: memref<1x32xf32, #tpu.memory_space<vmem>>, %arg4: memref<1x32xf32, #tpu.memory_space<vmem>>, %arg5: memref<32x32xf32, #tpu.memory_space<vmem>>, %arg6: memref<1x32xf32, #tpu.memory_space<vmem>>, %arg7: memref<1x32xf32, #tpu.memory_space<vmem>>, %arg8: memref<1x32xf32, #tpu.memory_space<vmem>>, %arg9: memref<32x32xf32, #tpu.memory_space<vmem>>, %arg10: memref<32x32xf32, #tpu.memory_space<vmem>>, %arg11: memref<32x32xf32, #tpu.memory_space<vmem>>, %arg12: memref<1x32xf32, #tpu.memory_space<vmem>>, %arg13: memref<1x32xf32, #tpu.memory_space<vmem>>, %arg14: memref<1x32xf32, #tpu.memory_space<vmem>>, %arg15: memref<32x32xf32, #tpu.memory_space<vmem>>, %arg16: memref<1x32xf32, #tpu.memory_space<vmem>>, %arg17: memref<16x32xf32, #tpu.memory_space<vmem>>, %arg18: memref<2x8x8xf32, #tpu.memory_space<vmem>>, %arg19: memref<16x32xf32, #tpu.memory_space<vmem>>) attributes {dimension_semantics = [], scalar_prefetch = 0 : i64, scratch_operands = 1 : i64, tpu.core_type = #tpu.core_type<tc>} {
    %c0 = arith.constant 0 : index
    %c0_0 = arith.constant 0 : index
    %0 = vector.load %arg0[%c0, %c0_0] : memref<16x16xf32, #tpu.memory_space<vmem>>, vector<16x16xf32>
    %c0_1 = arith.constant 0 : index
    %c0_2 = arith.constant 0 : index
    %1 = vector.load %arg1[%c0_1, %c0_2] : memref<16x32xf32, #tpu.memory_space<vmem>>, vector<16x32xf32>
    %cst = arith.constant dense<0.000000e+00> : vector<16x32xf32>
    %2 = tpu.matmul %0, %1, %cst {dimension_numbers = #tpu.dot_dimension_numbers<[1], [0], [0], [1], [0, 0, 1, 1], [], []>} : vector<16x16xf32>, vector<16x32xf32>, vector<16x32xf32> -> vector<16x32xf32>
    %c0_3 = arith.constant 0 : index
    %c0_4 = arith.constant 0 : index
    %3 = vector.load %arg2[%c0_3, %c0_4] : memref<1x32xf32, #tpu.memory_space<vmem>>, vector<1x32xf32>
    %4 = vector.broadcast %3 : vector<1x32xf32> to vector<16x32xf32>
    %5 = arith.addf %2, %4 : vector<16x32xf32>
    %cst_5 = arith.constant dense<0.000000e+00> : vector<16xf32>
    %6 = vector.multi_reduction <add>, %5, %cst_5 [1] : vector<16x32xf32> to vector<16xf32>
    %7 = vector.shape_cast %6 : vector<16xf32> to vector<16x1xf32>
    %cst_6 = arith.constant 3.200000e+01 : f32
    %8 = vector.broadcast %cst_6 : f32 to vector<16x1xf32>
    %9 = arith.divf %7, %8 : vector<16x1xf32>
    %10 = vector.broadcast %9 : vector<16x1xf32> to vector<16x32xf32>
    %11 = arith.subf %5, %10 : vector<16x32xf32>
    %12 = arith.mulf %11, %11 : vector<16x32xf32>
    %cst_7 = arith.constant dense<0.000000e+00> : vector<16xf32>
    %13 = vector.multi_reduction <add>, %12, %cst_7 [1] : vector<16x32xf32> to vector<16xf32>
    %14 = vector.shape_cast %13 : vector<16xf32> to vector<16x1xf32>
    %cst_8 = arith.constant 3.200000e+01 : f32
    %15 = vector.broadcast %cst_8 : f32 to vector<16x1xf32>
    %16 = arith.divf %14, %15 : vector<16x1xf32>
    %17 = vector.broadcast %9 : vector<16x1xf32> to vector<16x32xf32>
    %18 = arith.subf %5, %17 : vector<16x32xf32>
    %cst_9 = arith.constant 9.99999974E-6 : f32
    %19 = vector.broadcast %cst_9 : f32 to vector<16x1xf32>
    %20 = arith.addf %16, %19 : vector<16x1xf32>
    %21 = math.rsqrt %20 : vector<16x1xf32>
    %22 = vector.broadcast %21 : vector<16x1xf32> to vector<16x32xf32>
    %23 = arith.mulf %18, %22 : vector<16x32xf32>
    %c0_10 = arith.constant 0 : index
    %c0_11 = arith.constant 0 : index
    %24 = vector.load %arg3[%c0_10, %c0_11] : memref<1x32xf32, #tpu.memory_space<vmem>>, vector<1x32xf32>
    %25 = vector.broadcast %24 : vector<1x32xf32> to vector<16x32xf32>
    %26 = arith.mulf %23, %25 : vector<16x32xf32>
    %c0_12 = arith.constant 0 : index
    %c0_13 = arith.constant 0 : index
    %27 = vector.load %arg4[%c0_12, %c0_13] : memref<1x32xf32, #tpu.memory_space<vmem>>, vector<1x32xf32>
    %28 = vector.broadcast %27 : vector<1x32xf32> to vector<16x32xf32>
    %29 = arith.addf %26, %28 : vector<16x32xf32>
    %cst_14 = arith.constant 5.000000e-01 : f32
    %30 = vector.broadcast %cst_14 : f32 to vector<16x32xf32>
    %31 = arith.mulf %30, %29 : vector<16x32xf32>
    %cst_15 = arith.constant 0.707106769 : f32
    %32 = vector.broadcast %cst_15 : f32 to vector<16x32xf32>
    %33 = arith.mulf %29, %32 : vector<16x32xf32>
    %34 = math.erf %33 : vector<16x32xf32>
    %cst_16 = arith.constant 1.000000e+00 : f32
    %35 = vector.broadcast %cst_16 : f32 to vector<16x32xf32>
    %36 = arith.addf %35, %34 : vector<16x32xf32>
    %37 = arith.mulf %31, %36 : vector<16x32xf32>
    %c0_17 = arith.constant 0 : index
    %c0_18 = arith.constant 0 : index
    %38 = vector.load %arg5[%c0_17, %c0_18] : memref<32x32xf32, #tpu.memory_space<vmem>>, vector<32x32xf32>
    %cst_19 = arith.constant dense<0.000000e+00> : vector<16x32xf32>
    %39 = tpu.matmul %37, %38, %cst_19 {dimension_numbers = #tpu.dot_dimension_numbers<[1], [0], [0], [1], [0, 0, 1, 1], [], []>} : vector<16x32xf32>, vector<32x32xf32>, vector<16x32xf32> -> vector<16x32xf32>
    %c0_20 = arith.constant 0 : index
    %c0_21 = arith.constant 0 : index
    %40 = vector.load %arg6[%c0_20, %c0_21] : memref<1x32xf32, #tpu.memory_space<vmem>>, vector<1x32xf32>
    %41 = vector.broadcast %40 : vector<1x32xf32> to vector<16x32xf32>
    %42 = arith.addf %39, %41 : vector<16x32xf32>
    %cst_22 = arith.constant dense<0.000000e+00> : vector<16xf32>
    %43 = vector.multi_reduction <add>, %42, %cst_22 [1] : vector<16x32xf32> to vector<16xf32>
    %44 = vector.shape_cast %43 : vector<16xf32> to vector<16x1xf32>
    %cst_23 = arith.constant 3.200000e+01 : f32
    %45 = vector.broadcast %cst_23 : f32 to vector<16x1xf32>
    %46 = arith.divf %44, %45 : vector<16x1xf32>
    %47 = vector.broadcast %46 : vector<16x1xf32> to vector<16x32xf32>
    %48 = arith.subf %42, %47 : vector<16x32xf32>
    %49 = arith.mulf %48, %48 : vector<16x32xf32>
    %cst_24 = arith.constant dense<0.000000e+00> : vector<16xf32>
    %50 = vector.multi_reduction <add>, %49, %cst_24 [1] : vector<16x32xf32> to vector<16xf32>
    %51 = vector.shape_cast %50 : vector<16xf32> to vector<16x1xf32>
    %cst_25 = arith.constant 3.200000e+01 : f32
    %52 = vector.broadcast %cst_25 : f32 to vector<16x1xf32>
    %53 = arith.divf %51, %52 : vector<16x1xf32>
    %54 = vector.broadcast %46 : vector<16x1xf32> to vector<16x32xf32>
    %55 = arith.subf %42, %54 : vector<16x32xf32>
    %cst_26 = arith.constant 9.99999974E-6 : f32
    %56 = vector.broadcast %cst_26 : f32 to vector<16x1xf32>
    %57 = arith.addf %53, %56 : vector<16x1xf32>
    %58 = math.rsqrt %57 : vector<16x1xf32>
    %59 = vector.broadcast %58 : vector<16x1xf32> to vector<16x32xf32>
    %60 = arith.mulf %55, %59 : vector<16x32xf32>
    %c0_27 = arith.constant 0 : index
    %c0_28 = arith.constant 0 : index
    %61 = vector.load %arg7[%c0_27, %c0_28] : memref<1x32xf32, #tpu.memory_space<vmem>>, vector<1x32xf32>
    %62 = vector.broadcast %61 : vector<1x32xf32> to vector<16x32xf32>
    %63 = arith.mulf %60, %62 : vector<16x32xf32>
    %c0_29 = arith.constant 0 : index
    %c0_30 = arith.constant 0 : index
    %64 = vector.load %arg8[%c0_29, %c0_30] : memref<1x32xf32, #tpu.memory_space<vmem>>, vector<1x32xf32>
    %65 = vector.broadcast %64 : vector<1x32xf32> to vector<16x32xf32>
    %66 = arith.addf %63, %65 : vector<16x32xf32>
    %cst_31 = arith.constant 5.000000e-01 : f32
    %67 = vector.broadcast %cst_31 : f32 to vector<16x32xf32>
    %68 = arith.mulf %67, %66 : vector<16x32xf32>
    %cst_32 = arith.constant 0.707106769 : f32
    %69 = vector.broadcast %cst_32 : f32 to vector<16x32xf32>
    %70 = arith.mulf %66, %69 : vector<16x32xf32>
    %71 = math.erf %70 : vector<16x32xf32>
    %cst_33 = arith.constant 1.000000e+00 : f32
    %72 = vector.broadcast %cst_33 : f32 to vector<16x32xf32>
    %73 = arith.addf %72, %71 : vector<16x32xf32>
    %74 = arith.mulf %68, %73 : vector<16x32xf32>
    %c0_34 = arith.constant 0 : index
    %c0_35 = arith.constant 0 : index
    %75 = vector.load %arg9[%c0_34, %c0_35] : memref<32x32xf32, #tpu.memory_space<vmem>>, vector<32x32xf32>
    %cst_36 = arith.constant dense<0.000000e+00> : vector<16x32xf32>
    %76 = tpu.matmul %74, %75, %cst_36 {dimension_numbers = #tpu.dot_dimension_numbers<[1], [0], [0], [1], [0, 0, 1, 1], [], []>} : vector<16x32xf32>, vector<32x32xf32>, vector<16x32xf32> -> vector<16x32xf32>
    %c0_37 = arith.constant 0 : index
    %c0_38 = arith.constant 0 : index
    %77 = vector.load %arg12[%c0_37, %c0_38] : memref<1x32xf32, #tpu.memory_space<vmem>>, vector<1x32xf32>
    %78 = vector.broadcast %77 : vector<1x32xf32> to vector<16x32xf32>
    %79 = arith.addf %76, %78 : vector<16x32xf32>
    %c0_39 = arith.constant 0 : index
    %c0_40 = arith.constant 0 : index
    %80 = vector.load %arg10[%c0_39, %c0_40] : memref<32x32xf32, #tpu.memory_space<vmem>>, vector<32x32xf32>
    %cst_41 = arith.constant dense<0.000000e+00> : vector<16x32xf32>
    %81 = tpu.matmul %74, %80, %cst_41 {dimension_numbers = #tpu.dot_dimension_numbers<[1], [0], [0], [1], [0, 0, 1, 1], [], []>} : vector<16x32xf32>, vector<32x32xf32>, vector<16x32xf32> -> vector<16x32xf32>
    %c0_42 = arith.constant 0 : index
    %c0_43 = arith.constant 0 : index
    %82 = vector.load %arg13[%c0_42, %c0_43] : memref<1x32xf32, #tpu.memory_space<vmem>>, vector<1x32xf32>
    %83 = vector.broadcast %82 : vector<1x32xf32> to vector<16x32xf32>
    %84 = arith.addf %81, %83 : vector<16x32xf32>
    %c0_44 = arith.constant 0 : index
    %c0_45 = arith.constant 0 : index
    %85 = vector.load %arg11[%c0_44, %c0_45] : memref<32x32xf32, #tpu.memory_space<vmem>>, vector<32x32xf32>
    %cst_46 = arith.constant dense<0.000000e+00> : vector<16x32xf32>
    %86 = tpu.matmul %74, %85, %cst_46 {dimension_numbers = #tpu.dot_dimension_numbers<[1], [0], [0], [1], [0, 0, 1, 1], [], []>} : vector<16x32xf32>, vector<32x32xf32>, vector<16x32xf32> -> vector<16x32xf32>
    %c0_47 = arith.constant 0 : index
    %c0_48 = arith.constant 0 : index
    %87 = vector.load %arg14[%c0_47, %c0_48] : memref<1x32xf32, #tpu.memory_space<vmem>>, vector<1x32xf32>
    %88 = vector.broadcast %87 : vector<1x32xf32> to vector<16x32xf32>
    %89 = arith.addf %86, %88 : vector<16x32xf32>
    %90 = vector.shape_cast %79 : vector<16x32xf32> to vector<2x8x32xf32>
    %91 = vector.shape_cast %84 : vector<16x32xf32> to vector<2x8x32xf32>
    %92 = vector.shape_cast %89 : vector<16x32xf32> to vector<2x8x32xf32>
    %93 = vector.extract_strided_slice %90 {offsets = [0, 0, 0], sizes = [2, 8, 8], strides = [1, 1, 1]} : vector<2x8x32xf32> to vector<2x8x8xf32>
    %94 = vector.extract_strided_slice %91 {offsets = [0, 0, 0], sizes = [2, 8, 8], strides = [1, 1, 1]} : vector<2x8x32xf32> to vector<2x8x8xf32>
    %95 = vector.extract_strided_slice %92 {offsets = [0, 0, 0], sizes = [2, 8, 8], strides = [1, 1, 1]} : vector<2x8x32xf32> to vector<2x8x8xf32>
    "tpu.trace_start"() <{level = 10 : i32, message = "nld,nmd->nlm"}> : () -> ()
    %cst_49 = arith.constant dense<0.000000e+00> : vector<2x8x8xf32>
    %96 = tpu.matmul %93, %94, %cst_49 {dimension_numbers = #tpu.dot_dimension_numbers<[2], [2], [1], [1], [0, 0, 0, 1, 1, 1], [0], [0]>} : vector<2x8x8xf32>, vector<2x8x8xf32>, vector<2x8x8xf32> -> vector<2x8x8xf32>
    "tpu.trace_stop"() : () -> ()
    %cst_50 = arith.constant dense<0xFF800000> : vector<2x8xf32>
    %97 = vector.multi_reduction <maximumf>, %96, %cst_50 [2] : vector<2x8x8xf32> to vector<2x8xf32>
    %98 = vector.shape_cast %97 : vector<2x8xf32> to vector<2x8x1xf32>
    %99 = vector.broadcast %98 : vector<2x8x1xf32> to vector<2x8x8xf32>
    %100 = arith.subf %96, %99 : vector<2x8x8xf32>
    %101 = math.exp %100 : vector<2x8x8xf32>
    %cst_51 = arith.constant dense<0.000000e+00> : vector<2x8xf32>
    %102 = vector.multi_reduction <add>, %101, %cst_51 [2] : vector<2x8x8xf32> to vector<2x8xf32>
    %103 = vector.shape_cast %102 : vector<2x8xf32> to vector<2x8x1xf32>
    %104 = vector.broadcast %103 : vector<2x8x1xf32> to vector<2x8x8xf32>
    %105 = arith.divf %101, %104 : vector<2x8x8xf32>
    "tpu.trace_start"() <{level = 10 : i32, message = "nlm,nmd->nld"}> : () -> ()
    %cst_52 = arith.constant dense<0.000000e+00> : vector<2x8x8xf32>
    %106 = tpu.matmul %105, %95, %cst_52 {dimension_numbers = #tpu.dot_dimension_numbers<[2], [1], [1], [2], [0, 0, 0, 1, 1, 2], [0], [0]>} : vector<2x8x8xf32>, vector<2x8x8xf32>, vector<2x8x8xf32> -> vector<2x8x8xf32>
    "tpu.trace_stop"() : () -> ()
    %107 = vector.shape_cast %106 : vector<2x8x8xf32> to vector<16x8xf32>
    %c0_53 = arith.constant 0 : index
    %c0_54 = arith.constant 0 : index
    %108 = vector.load %arg19[%c0_53, %c0_54] : memref<16x32xf32, #tpu.memory_space<vmem>>, vector<16x8xf32>
    tpu.vector_store %arg19[%c0_53, %c0_54], %107 {strides = array<i32>} : memref<16x32xf32, #tpu.memory_space<vmem>>, vector<16x8xf32>,
    %109 = vector.extract_strided_slice %90 {offsets = [0, 0, 8], sizes = [2, 8, 8], strides = [1, 1, 1]} : vector<2x8x32xf32> to vector<2x8x8xf32>
    %110 = vector.extract_strided_slice %91 {offsets = [0, 0, 8], sizes = [2, 8, 8], strides = [1, 1, 1]} : vector<2x8x32xf32> to vector<2x8x8xf32>
    %111 = vector.extract_strided_slice %92 {offsets = [0, 0, 8], sizes = [2, 8, 8], strides = [1, 1, 1]} : vector<2x8x32xf32> to vector<2x8x8xf32>
    "tpu.trace_start"() <{level = 10 : i32, message = "nld,nmd->nlm"}> : () -> ()
    %cst_55 = arith.constant dense<0.000000e+00> : vector<2x8x8xf32>
    %112 = tpu.matmul %109, %110, %cst_55 {dimension_numbers = #tpu.dot_dimension_numbers<[2], [2], [1], [1], [0, 0, 0, 1, 1, 1], [0], [0]>} : vector<2x8x8xf32>, vector<2x8x8xf32>, vector<2x8x8xf32> -> vector<2x8x8xf32>
    "tpu.trace_stop"() : () -> ()
    %cst_56 = arith.constant dense<0xFF800000> : vector<2x8xf32>
    %113 = vector.multi_reduction <maximumf>, %112, %cst_56 [2] : vector<2x8x8xf32> to vector<2x8xf32>
    %114 = vector.shape_cast %113 : vector<2x8xf32> to vector<2x8x1xf32>
    %115 = vector.broadcast %114 : vector<2x8x1xf32> to vector<2x8x8xf32>
    %116 = arith.subf %112, %115 : vector<2x8x8xf32>
    %117 = math.exp %116 : vector<2x8x8xf32>
    %cst_57 = arith.constant dense<0.000000e+00> : vector<2x8xf32>
    %118 = vector.multi_reduction <add>, %117, %cst_57 [2] : vector<2x8x8xf32> to vector<2x8xf32>
    %119 = vector.shape_cast %118 : vector<2x8xf32> to vector<2x8x1xf32>
    %120 = vector.broadcast %119 : vector<2x8x1xf32> to vector<2x8x8xf32>
    %121 = arith.divf %117, %120 : vector<2x8x8xf32>
    "tpu.trace_start"() <{level = 10 : i32, message = "nlm,nmd->nld"}> : () -> ()
    %cst_58 = arith.constant dense<0.000000e+00> : vector<2x8x8xf32>
    %122 = tpu.matmul %121, %111, %cst_58 {dimension_numbers = #tpu.dot_dimension_numbers<[2], [1], [1], [2], [0, 0, 0, 1, 1, 2], [0], [0]>} : vector<2x8x8xf32>, vector<2x8x8xf32>, vector<2x8x8xf32> -> vector<2x8x8xf32>
    "tpu.trace_stop"() : () -> ()
    %123 = vector.shape_cast %122 : vector<2x8x8xf32> to vector<16x8xf32>
    %c0_59 = arith.constant 0 : index
    %c8 = arith.constant 8 : index
    %124 = vector.load %arg19[%c0_59, %c8] : memref<16x32xf32, #tpu.memory_space<vmem>>, vector<16x8xf32>
    tpu.vector_store %arg19[%c0_59, %c8], %123 {strides = array<i32>} : memref<16x32xf32, #tpu.memory_space<vmem>>, vector<16x8xf32>,
    %125 = arith.addf %105, %121 : vector<2x8x8xf32>
    %126 = vector.extract_strided_slice %90 {offsets = [0, 0, 16], sizes = [2, 8, 8], strides = [1, 1, 1]} : vector<2x8x32xf32> to vector<2x8x8xf32>
    %127 = vector.extract_strided_slice %91 {offsets = [0, 0, 16], sizes = [2, 8, 8], strides = [1, 1, 1]} : vector<2x8x32xf32> to vector<2x8x8xf32>
    %128 = vector.extract_strided_slice %92 {offsets = [0, 0, 16], sizes = [2, 8, 8], strides = [1, 1, 1]} : vector<2x8x32xf32> to vector<2x8x8xf32>
    "tpu.trace_start"() <{level = 10 : i32, message = "nld,nmd->nlm"}> : () -> ()
    %cst_60 = arith.constant dense<0.000000e+00> : vector<2x8x8xf32>
    %129 = tpu.matmul %126, %127, %cst_60 {dimension_numbers = #tpu.dot_dimension_numbers<[2], [2], [1], [1], [0, 0, 0, 1, 1, 1], [0], [0]>} : vector<2x8x8xf32>, vector<2x8x8xf32>, vector<2x8x8xf32> -> vector<2x8x8xf32>
    "tpu.trace_stop"() : () -> ()
    %cst_61 = arith.constant dense<0xFF800000> : vector<2x8xf32>
    %130 = vector.multi_reduction <maximumf>, %129, %cst_61 [2] : vector<2x8x8xf32> to vector<2x8xf32>
    %131 = vector.shape_cast %130 : vector<2x8xf32> to vector<2x8x1xf32>
    %132 = vector.broadcast %131 : vector<2x8x1xf32> to vector<2x8x8xf32>
    %133 = arith.subf %129, %132 : vector<2x8x8xf32>
    %134 = math.exp %133 : vector<2x8x8xf32>
    %cst_62 = arith.constant dense<0.000000e+00> : vector<2x8xf32>
    %135 = vector.multi_reduction <add>, %134, %cst_62 [2] : vector<2x8x8xf32> to vector<2x8xf32>
    %136 = vector.shape_cast %135 : vector<2x8xf32> to vector<2x8x1xf32>
    %137 = vector.broadcast %136 : vector<2x8x1xf32> to vector<2x8x8xf32>
    %138 = arith.divf %134, %137 : vector<2x8x8xf32>
    "tpu.trace_start"() <{level = 10 : i32, message = "nlm,nmd->nld"}> : () -> ()
    %cst_63 = arith.constant dense<0.000000e+00> : vector<2x8x8xf32>
    %139 = tpu.matmul %138, %128, %cst_63 {dimension_numbers = #tpu.dot_dimension_numbers<[2], [1], [1], [2], [0, 0, 0, 1, 1, 2], [0], [0]>} : vector<2x8x8xf32>, vector<2x8x8xf32>, vector<2x8x8xf32> -> vector<2x8x8xf32>
    "tpu.trace_stop"() : () -> ()
    %140 = vector.shape_cast %139 : vector<2x8x8xf32> to vector<16x8xf32>
    %c0_64 = arith.constant 0 : index
    %c16 = arith.constant 16 : index
    %141 = vector.load %arg19[%c0_64, %c16] : memref<16x32xf32, #tpu.memory_space<vmem>>, vector<16x8xf32>
    tpu.vector_store %arg19[%c0_64, %c16], %140 {strides = array<i32>} : memref<16x32xf32, #tpu.memory_space<vmem>>, vector<16x8xf32>,
    %142 = arith.addf %125, %138 : vector<2x8x8xf32>
    %143 = vector.extract_strided_slice %90 {offsets = [0, 0, 24], sizes = [2, 8, 8], strides = [1, 1, 1]} : vector<2x8x32xf32> to vector<2x8x8xf32>
    %144 = vector.extract_strided_slice %91 {offsets = [0, 0, 24], sizes = [2, 8, 8], strides = [1, 1, 1]} : vector<2x8x32xf32> to vector<2x8x8xf32>
    %145 = vector.extract_strided_slice %92 {offsets = [0, 0, 24], sizes = [2, 8, 8], strides = [1, 1, 1]} : vector<2x8x32xf32> to vector<2x8x8xf32>
    "tpu.trace_start"() <{level = 10 : i32, message = "nld,nmd->nlm"}> : () -> ()
    %cst_65 = arith.constant dense<0.000000e+00> : vector<2x8x8xf32>
    %146 = tpu.matmul %143, %144, %cst_65 {dimension_numbers = #tpu.dot_dimension_numbers<[2], [2], [1], [1], [0, 0, 0, 1, 1, 1], [0], [0]>} : vector<2x8x8xf32>, vector<2x8x8xf32>, vector<2x8x8xf32> -> vector<2x8x8xf32>
    "tpu.trace_stop"() : () -> ()
    %cst_66 = arith.constant dense<0xFF800000> : vector<2x8xf32>
    %147 = vector.multi_reduction <maximumf>, %146, %cst_66 [2] : vector<2x8x8xf32> to vector<2x8xf32>
    %148 = vector.shape_cast %147 : vector<2x8xf32> to vector<2x8x1xf32>
    %149 = vector.broadcast %148 : vector<2x8x1xf32> to vector<2x8x8xf32>
    %150 = arith.subf %146, %149 : vector<2x8x8xf32>
    %151 = math.exp %150 : vector<2x8x8xf32>
    %cst_67 = arith.constant dense<0.000000e+00> : vector<2x8xf32>
    %152 = vector.multi_reduction <add>, %151, %cst_67 [2] : vector<2x8x8xf32> to vector<2x8xf32>
    %153 = vector.shape_cast %152 : vector<2x8xf32> to vector<2x8x1xf32>
    %154 = vector.broadcast %153 : vector<2x8x1xf32> to vector<2x8x8xf32>
    %155 = arith.divf %151, %154 : vector<2x8x8xf32>
    "tpu.trace_start"() <{level = 10 : i32, message = "nlm,nmd->nld"}> : () -> ()
    %cst_68 = arith.constant dense<0.000000e+00> : vector<2x8x8xf32>
    %156 = tpu.matmul %155, %145, %cst_68 {dimension_numbers = #tpu.dot_dimension_numbers<[2], [1], [1], [2], [0, 0, 0, 1, 1, 2], [0], [0]>} : vector<2x8x8xf32>, vector<2x8x8xf32>, vector<2x8x8xf32> -> vector<2x8x8xf32>
    "tpu.trace_stop"() : () -> ()
    %157 = vector.shape_cast %156 : vector<2x8x8xf32> to vector<16x8xf32>
    %c0_69 = arith.constant 0 : index
    %c24 = arith.constant 24 : index
    %158 = vector.load %arg19[%c0_69, %c24] : memref<16x32xf32, #tpu.memory_space<vmem>>, vector<16x8xf32>
    tpu.vector_store %arg19[%c0_69, %c24], %157 {strides = array<i32>} : memref<16x32xf32, #tpu.memory_space<vmem>>, vector<16x8xf32>,
    %159 = arith.addf %142, %155 : vector<2x8x8xf32>
    %c0_70 = arith.constant 0 : index
    %c0_71 = arith.constant 0 : index
    %160 = vector.load %arg19[%c0_70, %c0_71] : memref<16x32xf32, #tpu.memory_space<vmem>>, vector<16x32xf32>
    %c0_72 = arith.constant 0 : index
    %c0_73 = arith.constant 0 : index
    %161 = vector.load %arg15[%c0_72, %c0_73] : memref<32x32xf32, #tpu.memory_space<vmem>>, vector<32x32xf32>
    %cst_74 = arith.constant dense<0.000000e+00> : vector<16x32xf32>
    %162 = tpu.matmul %160, %161, %cst_74 {dimension_numbers = #tpu.dot_dimension_numbers<[1], [0], [0], [1], [0, 0, 1, 1], [], []>} : vector<16x32xf32>, vector<32x32xf32>, vector<16x32xf32> -> vector<16x32xf32>
    %c0_75 = arith.constant 0 : index
    %c0_76 = arith.constant 0 : index
    %163 = vector.load %arg16[%c0_75, %c0_76] : memref<1x32xf32, #tpu.memory_space<vmem>>, vector<1x32xf32>
    %164 = vector.broadcast %163 : vector<1x32xf32> to vector<16x32xf32>
    %165 = arith.addf %162, %164 : vector<16x32xf32>
    %c0_77 = arith.constant 0 : index
    %c0_78 = arith.constant 0 : index
    %166 = vector.load %arg17[%c0_77, %c0_78] : memref<16x32xf32, #tpu.memory_space<vmem>>, vector<16x32xf32>
    tpu.vector_store %arg17[%c0_77, %c0_78], %165 {strides = array<i32>} : memref<16x32xf32, #tpu.memory_space<vmem>>, vector<16x32xf32>,
    %cst_79 = arith.constant 2.500000e-01 : f32
    %167 = vector.broadcast %cst_79 : f32 to vector<2x8x8xf32>
    %168 = arith.mulf %159, %167 : vector<2x8x8xf32>
    %c0_80 = arith.constant 0 : index
    %c0_81 = arith.constant 0 : index
    %c0_82 = arith.constant 0 : index
    %169 = vector.load %arg18[%c0_80, %c0_81, %c0_82] : memref<2x8x8xf32, #tpu.memory_space<vmem>>, vector<2x8x8xf32>
    tpu.vector_store %arg18[%c0_80, %c0_81, %c0_82], %168 {strides = array<i32>} : memref<2x8x8xf32, #tpu.memory_space<vmem>>, vector<2x8x8xf32>,
    return
  }
}

</mosaic_0001>

<llo_original>
// kernel: deep_processor_forward.1
$region0: #{deep_processor_forward.1}
  #allocation0 [shape = 'u32[]', space=smem, size = 0x4, offset = 0x4, fixed_abs, tag = 'smem constant byte address 0x4 - core index']
  #allocation1 [shape = 'u32[144,128]{1,0:T(1,128)}', space=vmem, size = 0x12000, scoped, tag = 'internal scratch']
  #allocation2 [shape = 'f32[16,32]{1,0:T(8,128)}', space=vmem, size = 0x2000, scoped, tag = 'scratch operand']
  %s0 = inlined_call_operand.vmem [shape: f32[16,16], index: 0, kind: input, shape index: {}]
  %s1 = inlined_call_operand.hbm [shape: f32[16,32], index: 1, kind: input, shape index: {}]
  %s2 = inlined_call_operand.vmem [shape: f32[1,32], index: 2, kind: input, shape index: {}]
  %s3 = inlined_call_operand.vmem [shape: f32[1,32], index: 3, kind: input, shape index: {}]
  %s4 = inlined_call_operand.hbm [shape: f32[1,32], index: 4, kind: input, shape index: {}]
  %s5 = inlined_call_operand.vmem [shape: f32[32,32], index: 5, kind: input, shape index: {}]
  %s6 = inlined_call_operand.hbm [shape: f32[1,32], index: 6, kind: input, shape index: {}]
  %s7 = inlined_call_operand.hbm [shape: f32[1,32], index: 7, kind: input, shape index: {}]
  %s8 = inlined_call_operand.hbm [shape: f32[1,32], index: 8, kind: input, shape index: {}]
  %s9 = inlined_call_operand.vmem [shape: f32[32,32], index: 9, kind: input, shape index: {}]
  %s10 = inlined_call_operand.hbm [shape: f32[32,32], index: 10, kind: input, shape index: {}]
  %s11 = inlined_call_operand.hbm [shape: f32[32,32], index: 11, kind: input, shape index: {}]
  %s12 = inlined_call_operand.vmem [shape: f32[1,32], index: 12, kind: input, shape index: {}]
  %s13 = inlined_call_operand.vmem [shape: f32[1,32], index: 13, kind: input, shape index: {}]
  %s14 = inlined_call_operand.vmem [shape: f32[1,32], index: 14, kind: input, shape index: {}]
  %s15 = inlined_call_operand.hbm [shape: f32[32,32], index: 15, kind: input, shape index: {}]
  %s16 = inlined_call_operand.vmem [shape: f32[1,32], index: 16, kind: input, shape index: {}]
  %s17 = inlined_call_operand.vmem [shape: f32[16,32], index: 17, kind: output, shape index: {0}]
  %s18 = inlined_call_operand.hbm [shape: f32[2,8,8], index: 18, kind: output, shape index: {1}]
  %19 = xla_tuple %s17, %s18
  %s20 = sld [smem:[#allocation0]]
  $region118: #{deep_processor_forward.1} parent=0
    _
  %s22 = ssub.s32 1, %s20
  %s23 = scalar_select 0, %s22, %s20
  $region1: #{deep_processor_forward.1} parent=0
    #allocation3 [shape = 'u8[8192]{0}', space=vmem, size = 0x2000, scoped, tag = 'input window, operand 1, single buffered']
    #allocation4 [shape = 's32[1]{0}', space=sflag, size = 0x4, scoped, tag = 'scoped memory for deep_processor_forward.1']
    #allocation5 [shape = 's32[1]{0}', space=sflag, size = 0x4, scoped, tag = 'scoped memory for deep_processor_forward.1']
    #allocation6 [shape = 'u8[512]{0}', space=vmem, size = 0x400, scoped, tag = 'input window, operand 4, single buffered']
    #allocation7 [shape = 's32[1]{0}', space=sflag, size = 0x4, scoped, tag = 'scoped memory for deep_processor_forward.1']
    #allocation8 [shape = 'u8[512]{0}', space=vmem, size = 0x400, scoped, tag = 'input window, operand 6, single buffered']
    #allocation9 [shape = 'u8[512]{0}', space=vmem, size = 0x400, scoped, tag = 'input window, operand 7, single buffered']
    #allocation10 [shape = 's32[1]{0}', space=sflag, size = 0x4, scoped, tag = 'scoped memory for deep_processor_forward.1']
    #allocation11 [shape = 'u8[512]{0}', space=vmem, size = 0x400, scoped, tag = 'input window, operand 8, single buffered']
    #allocation12 [shape = 'u8[16384]{0}', space=vmem, size = 0x4000, scoped, tag = 'input window, operand 10, single buffered']
    #allocation13 [shape = 's32[1]{0}', space=sflag, size = 0x4, scoped, tag = 'scoped memory for deep_processor_forward.1']
    #allocation14 [shape = 'u8[16384]{0}', space=vmem, size = 0x4000, scoped, tag = 'input window, operand 11, single buffered']
    #allocation15 [shape = 'u8[16384]{0}', space=vmem, size = 0x4000, scoped, tag = 'input window, operand 15, single buffered']
    #allocation16 [shape = 's32[1]{0}', space=sflag, size = 0x4, scoped, tag = 'scoped memory for deep_processor_forward.1']
    #allocation17 [shape = 'u8[8192]{0}', space=vmem, size = 0x2000, scoped, tag = 'output window, operand 1, single buffered']
    %24 = vsyncpa [#allocation4], 0
    %25 = vsyncpa [#allocation7], 0
    %26 = vsyncpa [#allocation10], 0
    %27 = vsyncpa [#allocation13], 0
    %28 = vsyncpa [#allocation16], 0
    %29 = vsyncpa [#allocation5], 0
    // Predicated region
    $region2: #{deep_processor_forward.1} parent=1 // pred_check
      _
    $region3: #{deep_processor_forward.1} parent=1 // pred_check_branch
      %31 = sbr.rel (0) target = $region5
    $region4: #{deep_processor_forward.1} parent=1 // pred_region
      _
    $region5: #{deep_processor_forward.1} parent=1 // pred_fallthru
      _
    // Predicated region
    $region6: #{deep_processor_forward.1} parent=1 // pred_check
      _
    $region7: #{deep_processor_forward.1} parent=1 // pred_check_branch
      %33 = sbr.rel (0) target = $region9
    $region8: #{deep_processor_forward.1} parent=1 // pred_region
      %s35 = ssub.s32 256, 256
      %36 = vsyncadd [#allocation4], %s35
      %s37 = sshll.u32 [#allocation3], 4
      %s38 = int_to_ptr.vmem [resolvable:$true] %s37
      %43 = dma.hbm_to_vmem [thread:$0]  %s1, 256, %s38, [#allocation4], 128, 128, 8
    $region9: #{deep_processor_forward.1} parent=1 // pred_fallthru
      _
    // Predicated region
    $region10: #{deep_processor_forward.1} parent=1 // pred_check
      _
    $region11: #{deep_processor_forward.1} parent=1 // pred_check_branch
      %45 = sbr.rel (0) target = $region13
    $region12: #{deep_processor_forward.1} parent=1 // pred_region
      _
    $region13: #{deep_processor_forward.1} parent=1 // pred_fallthru
      _
    // Predicated region
    $region14: #{deep_processor_forward.1} parent=1 // pred_check
      _
    $region15: #{deep_processor_forward.1} parent=1 // pred_check_branch
      %47 = sbr.rel (0) target = $region17
    $region16: #{deep_processor_forward.1} parent=1 // pred_region
      _
    $region17: #{deep_processor_forward.1} parent=1 // pred_fallthru
      _
    // Predicated region
    $region18: #{deep_processor_forward.1} parent=1 // pred_check
      _
    $region19: #{deep_processor_forward.1} parent=1 // pred_check_branch
      %49 = sbr.rel (0) target = $region21
    $region20: #{deep_processor_forward.1} parent=1 // pred_region
      %s51 = ssub.s32 16, 16
      %52 = vsyncadd [#allocation7], %s51
      %s54 = sshll.u32 [#allocation6], 4
      %s55 = int_to_ptr.vmem [resolvable:$true] %s54
      %57 = dma.hbm_to_vmem [thread:$0]  %s4, 16, %s55, [#allocation7]
    $region21: #{deep_processor_forward.1} parent=1 // pred_fallthru
      _
    // Predicated region
    $region22: #{deep_processor_forward.1} parent=1 // pred_check
      _
    $region23: #{deep_processor_forward.1} parent=1 // pred_check_branch
      %59 = sbr.rel (0) target = $region25
    $region24: #{deep_processor_forward.1} parent=1 // pred_region
      _
    $region25: #{deep_processor_forward.1} parent=1 // pred_fallthru
      _
    // Predicated region
    $region26: #{deep_processor_forward.1} parent=1 // pred_check
      _
    $region27: #{deep_processor_forward.1} parent=1 // pred_check_branch
      %61 = sbr.rel (0) target = $region29
    $region28: #{deep_processor_forward.1} parent=1 // pred_region
      %s63 = ssub.s32 16, 16
      %64 = vsyncadd [#allocation7], %s63
      %s66 = sshll.u32 [#allocation8], 4
      %s67 = int_to_ptr.vmem [resolvable:$true] %s66
      %69 = dma.hbm_to_vmem [thread:$0]  %s6, 16, %s67, [#allocation7]
    $region29: #{deep_processor_forward.1} parent=1 // pred_fallthru
      _
    // Predicated region
    $region30: #{deep_processor_forward.1} parent=1 // pred_check
      _
    $region31: #{deep_processor_forward.1} parent=1 // pred_check_branch
      %71 = sbr.rel (0) target = $region33
    $region32: #{deep_processor_forward.1} parent=1 // pred_region
      %s73 = ssub.s32 16, 16
      %74 = vsyncadd [#allocation10], %s73
      %s76 = sshll.u32 [#allocation9], 4
      %s77 = int_to_ptr.vmem [resolvable:$true] %s76
      %79 = dma.hbm_to_vmem [thread:$0]  %s7, 16, %s77, [#allocation10]
    $region33: #{deep_processor_forward.1} parent=1 // pred_fallthru
      _
    // Predicated region
    $region34: #{deep_processor_forward.1} parent=1 // pred_check
      _
    $region35: #{deep_processor_forward.1} parent=1 // pred_check_branch
      %81 = sbr.rel (0) target = $region37
    $region36: #{deep_processor_forward.1} parent=1 // pred_region
      %s83 = ssub.s32 16, 16
      %84 = vsyncadd [#allocation10], %s83
      %s86 = sshll.u32 [#allocation11], 4
      %s87 = int_to_ptr.vmem [resolvable:$true] %s86
      %89 = dma.hbm_to_vmem [thread:$0]  %s8, 16, %s87, [#allocation10]
    $region37: #{deep_processor_forward.1} parent=1 // pred_fallthru
      _
    // Predicated region
    $region38: #{deep_processor_forward.1} parent=1 // pred_check
      _
    $region39: #{deep_processor_forward.1} parent=1 // pred_check_branch
      %91 = sbr.rel (0) target = $region41
    $region40: #{deep_processor_forward.1} parent=1 // pred_region
      _
    $region41: #{deep_processor_forward.1} parent=1 // pred_fallthru
      _
    // Predicated region
    $region42: #{deep_processor_forward.1} parent=1 // pred_check
      _
    $region43: #{deep_processor_forward.1} parent=1 // pred_check_branch
      %93 = sbr.rel (0) target = $region45
    $region44: #{deep_processor_forward.1} parent=1 // pred_region
      %s95 = ssub.s32 512, 512
      %96 = vsyncadd [#allocation13], %s95
      %s97 = sshll.u32 [#allocation12], 4
      %s98 = int_to_ptr.vmem [resolvable:$true] %s97
      %103 = dma.hbm_to_vmem [thread:$0]  %s10, 512, %s98, [#allocation13], 128, 128, 8
    $region45: #{deep_processor_forward.1} parent=1 // pred_fallthru
      _
    // Predicated region
    $region46: #{deep_processor_forward.1} parent=1 // pred_check
      _
    $region47: #{deep_processor_forward.1} parent=1 // pred_check_branch
      %105 = sbr.rel (0) target = $region49
    $region48: #{deep_processor_forward.1} parent=1 // pred_region
      %s107 = ssub.s32 512, 512
      %108 = vsyncadd [#allocation13], %s107
      %s109 = sshll.u32 [#allocation14], 4
      %s110 = int_to_ptr.vmem [resolvable:$true] %s109
      %115 = dma.hbm_to_vmem [thread:$0]  %s11, 512, %s110, [#allocation13], 128, 128, 8
    $region49: #{deep_processor_forward.1} parent=1 // pred_fallthru
      _
    // Predicated region
    $region50: #{deep_processor_forward.1} parent=1 // pred_check
      _
    $region51: #{deep_processor_forward.1} parent=1 // pred_check_branch
      %117 = sbr.rel (0) target = $region53
    $region52: #{deep_processor_forward.1} parent=1 // pred_region
      _
    $region53: #{deep_processor_forward.1} parent=1 // pred_fallthru
      _
    // Predicated region
    $region54: #{deep_processor_forward.1} parent=1 // pred_check
      _
    $region55: #{deep_processor_forward.1} parent=1 // pred_check_branch
      %119 = sbr.rel (0) target = $region57
    $region56: #{deep_processor_forward.1} parent=1 // pred_region
      _
    $region57: #{deep_processor_forward.1} parent=1 // pred_fallthru
      _
    // Predicated region
    $region58: #{deep_processor_forward.1} parent=1 // pred_check
      _
    $region59: #{deep_processor_forward.1} parent=1 // pred_check_branch
      %121 = sbr.rel (0) target = $region61
    $region60: #{deep_processor_forward.1} parent=1 // pred_region
      _
    $region61: #{deep_processor_forward.1} parent=1 // pred_fallthru
      _
    // Predicated region
    $region62: #{deep_processor_forward.1} parent=1 // pred_check
      _
    $region63: #{deep_processor_forward.1} parent=1 // pred_check_branch
      %123 = sbr.rel (0) target = $region65
    $region64: #{deep_processor_forward.1} parent=1 // pred_region
      %s125 = ssub.s32 512, 512
      %126 = vsyncadd [#allocation16], %s125
      %s127 = sshll.u32 [#allocation15], 4
      %s128 = int_to_ptr.vmem [resolvable:$true] %s127
      %133 = dma.hbm_to_vmem [thread:$0]  %s15, 512, %s128, [#allocation16], 128, 128, 8
    $region65: #{deep_processor_forward.1} parent=1 // pred_fallthru
      _
    // Predicated region
    $region66: #{deep_processor_forward.1} parent=1 // pred_check
      _
    $region67: #{deep_processor_forward.1} parent=1 // pred_check_branch
      %135 = sbr.rel (0) target = $region69
    $region68: #{deep_processor_forward.1} parent=1 // pred_region
      _
    $region69: #{deep_processor_forward.1} parent=1 // pred_fallthru
      _
    // Predicated region
    $region70: #{deep_processor_forward.1} parent=1 // pred_check
      _
    $region71: #{deep_processor_forward.1} parent=1 // pred_check_branch
      %137 = sbr.rel (0) target = $region73
    $region72: #{deep_processor_forward.1} parent=1 // pred_region
      %138 = dma.done [#allocation4], 256
    $region73: #{deep_processor_forward.1} parent=1 // pred_fallthru
      _
    // Predicated region
    $region74: #{deep_processor_forward.1} parent=1 // pred_check
      _
    $region75: #{deep_processor_forward.1} parent=1 // pred_check_branch
      %140 = sbr.rel (0) target = $region77
    $region76: #{deep_processor_forward.1} parent=1 // pred_region
      %141 = dma.done [#allocation7], 16
    $region77: #{deep_processor_forward.1} parent=1 // pred_fallthru
      _
    // Predicated region
    $region78: #{deep_processor_forward.1} parent=1 // pred_check
      _
    $region79: #{deep_processor_forward.1} parent=1 // pred_check_branch
      %143 = sbr.rel (0) target = $region81
    $region80: #{deep_processor_forward.1} parent=1 // pred_region
      %144 = dma.done [#allocation7], 16
    $region81: #{deep_processor_forward.1} parent=1 // pred_fallthru
      _
    // Predicated region
    $region82: #{deep_processor_forward.1} parent=1 // pred_check
      _
    $region83: #{deep_processor_forward.1} parent=1 // pred_check_branch
      %146 = sbr.rel (0) target = $region85
    $region84: #{deep_processor_forward.1} parent=1 // pred_region
      %147 = dma.done [#allocation10], 16
    $region85: #{deep_processor_forward.1} parent=1 // pred_fallthru
      _
    // Predicated region
    $region86: #{deep_processor_forward.1} parent=1 // pred_check
      _
    $region87: #{deep_processor_forward.1} parent=1 // pred_check_branch
      %149 = sbr.rel (0) target = $region89
    $region88: #{deep_processor_forward.1} parent=1 // pred_region
      %150 = dma.done [#allocation10], 16
    $region89: #{deep_processor_forward.1} parent=1 // pred_fallthru
      _
    // Predicated region
    $region90: #{deep_processor_forward.1} parent=1 // pred_check
      _
    $region91: #{deep_processor_forward.1} parent=1 // pred_check_branch
      %152 = sbr.rel (0) target = $region93
    $region92: #{deep_processor_forward.1} parent=1 // pred_region
      %153 = dma.done [#allocation13], 512
    $region93: #{deep_processor_forward.1} parent=1 // pred_fallthru
      _
    // Predicated region
    $region94: #{deep_processor_forward.1} parent=1 // pred_check
      _
    $region95: #{deep_processor_forward.1} parent=1 // pred_check_branch
      %155 = sbr.rel (0) target = $region97
    $region96: #{deep_processor_forward.1} parent=1 // pred_region
      %156 = dma.done [#allocation13], 512
    $region97: #{deep_processor_forward.1} parent=1 // pred_fallthru
      _
    // Predicated region
    $region98: #{deep_processor_forward.1} parent=1 // pred_check
      _
    $region99: #{deep_processor_forward.1} parent=1 // pred_check_branch
      %158 = sbr.rel (0) target = $region101
    $region100: #{deep_processor_forward.1} parent=1 // pred_region
      %159 = dma.done [#allocation16], 512
    $region101: #{deep_processor_forward.1} parent=1 // pred_fallthru
      _
    %v160 = vld [vmem:[%s0] sm:$0xff]
    %v161 = vld [vmem:[%s0 + $0x8] sm:$0xff]
    %v162 = vld [vmem:[#allocation3] sm:$0xff]
    %v163 = vld [vmem:[#allocation3 + $0x8] sm:$0xff]
    %v164 = vld [vmem:[%s2] sm:$0x1]
    %v166 = vlaneseq
    %v167 = vshrl.u32 %v166, 7
    %v168 = vsub.s32 0, %v167
    %v169 = vrot.slane %v164, %v168
    %vm171 = vcmask 130048
    %v173 = vsel %vm171, %v160, 0
    %v176 = vsel %vm171, %v161, 0
    %178 = vmatprep.subr.mxu0 0.0
    %179 = vmatpush1.msra.mxu0 %v162
    %180 = vmatprep.subr.mxu0 0.0
    %181 = vmatpush1.msra.mxu0 %v163
    %182 = vmatprep.subr.mxu0 0.0
    %183 = vmatpush1.msra.mxu0 0.0
    %184 = vmatprep.subr.mxu0 0.0
    %185 = vmatpush1.msra.mxu0 0.0
    %186 = vmatprep.subr.mxu0 0.0
    %187 = vmatpush1.msra.mxu0 0.0
    %188 = vmatprep.subr.mxu0 0.0
    %189 = vmatpush1.msra.mxu0 0.0
    %190 = vmatprep.subr.mxu0 0.0
    %191 = vmatpush1.msra.mxu0 0.0
    %192 = vmatprep.subr.mxu0 0.0
    %193 = vmatpush1.msra.mxu0 0.0
    %194 = vmatprep.subr.mxu0 0.0
    %195 = vmatpush1.msra.mxu0 0.0
    %196 = vmatprep.subr.mxu0 0.0
    %197 = vmatpush1.msra.mxu0 0.0
    %198 = vmatprep.subr.mxu0 0.0
    %199 = vmatpush1.msra.mxu0 0.0
    %200 = vmatprep.subr.mxu0 0.0
    %201 = vmatpush1.msra.mxu0 0.0
    %202 = vmatprep.subr.mxu0 0.0
    %203 = vmatpush1.msra.mxu0 0.0
    %204 = vmatprep.subr.mxu0 0.0
    %205 = vmatpush1.msra.mxu0 0.0
    %206 = vmatprep.subr.mxu0 0.0
    %207 = vmatpush1.msra.mxu0 0.0
    %208 = vmatprep.subr.mxu0 0.0
    %209 = vmatpush1.msra.mxu0 0.0
    %210 = vmatprep.subr.mxu0 0.0
    %211 = vmatpush1.msra.mxu0 0.0
    %212 = vmatprep.subr.mxu0 0.0
    %213 = vmatpush1.msra.mxu0 0.0
    %214 = vmatprep.subr.mxu0 0.0
    %215 = vmatpush1.msra.mxu0 0.0
    %216 = vmatprep.subr.mxu0 0.0
    %217 = vmatpush1.msra.mxu0 0.0
    %218 = vmatprep.subr.mxu0 0.0
    %219 = vmatpush1.msra.mxu0 0.0
    %220 = vmatprep.subr.mxu0 0.0
    %221 = vmatpush1.msra.mxu0 0.0
    %222 = vmatprep.subr.mxu0 0.0
    %223 = vmatpush1.msra.mxu0 0.0
    %224 = vmatprep.subr.mxu0 0.0
    %225 = vmatpush1.msra.mxu0 0.0
    %226 = vmatprep.subr.mxu0 0.0
    %227 = vmatpush1.msra.mxu0 0.0
    %228 = vmatprep.subr.mxu0 0.0
    %229 = vmatpush1.msra.mxu0 0.0
    %230 = vmatprep.subr.mxu0 0.0
    %231 = vmatpush1.msra.mxu0 0.0
    %232 = vmatprep.subr.mxu0 0.0
    %233 = vmatpush1.msra.mxu0 0.0
    %234 = vmatprep.subr.mxu0 0.0
    %235 = vmatpush1.msra.mxu0 0.0
    %236 = vmatprep.subr.mxu0 0.0
    %237 = vmatpush1.msra.mxu0 0.0
    %238 = vmatprep.subr.mxu0 0.0
    %239 = vmatpush1.msra.mxu0 0.0
    %240 = vmatprep.subr.mxu0 0.0
    %241 = vmatpush1.msra.mxu0 0.0
    %242 = vmatprep.mubr.f32.mxu0 0.0
    %243 = vmatmul.mubr.f32.gmra.mrb[0].mxu0 %v173
    %v244 = vpop.f32.mrb[0].mxu0
    %v245 = vadd.f32 %v169, %v244
    %v246 = vpop.f32.mrb[0].mxu0
    %247 = vmatprep.mubr.f32.mxu0 0.0
    %248 = vmatmul.mubr.f32.gmra.mrb[0].mxu0 %v176
    %v249 = vpop.f32.mrb[0].mxu0
    %v250 = vadd.f32 %v169, %v249
    %v251 = vpop.f32.mrb[0].mxu0
    %252 = vdwg.mxu0
    %vm253 = vcmask 261120
    %v254 = vsel %vm253, %v245, 0.0
    %255 = vadd.xlane.f32.xlu0 %v254
    %v256 = vpop.xlane.xlu0 %255
    %v257 = vsel %vm253, %v250, 0.0
    %258 = vadd.xlane.f32.xlu0 %v257
    %v259 = vpop.xlane.xlu0 %258
    %v260 = vrcp.pop 32.0
    %v261 = vmul.f32 %v256, %v260
    %v262 = vmul.f32 %v259, %v260
    %v263 = vsub.f32 %v245, %v261
    %v264 = vsub.f32 %v250, %v262
    %v265 = vmul.f32 %v263, %v263
    %v266 = vmul.f32 %v264, %v264
    %v267 = vsel %vm253, %v265, 0.0
    %268 = vadd.xlane.f32.xlu0 %v267
    %v269 = vpop.xlane.xlu0 %268
    %v270 = vsel %vm253, %v266, 0.0
    %271 = vadd.xlane.f32.xlu0 %v270
    %v272 = vpop.xlane.xlu0 %271
    %v273 = vmul.f32 %v269, %v260
    %v274 = vmul.f32 %v272, %v260
    %v275 = vadd.f32 %v273, 1e-05
    %v276 = vadd.f32 %v274, 1e-05
    %v277 = vrsqrt.pop %v275
    %v278 = vrsqrt.pop %v276
    %v279 = vmul.f32 %v263, %v277
    %v280 = vmul.f32 %v264, %v278
    %v281 = vld [vmem:[%s3] sm:$0x1]
    %v283 = vlaneseq
    %v284 = vshrl.u32 %v283, 7
    %v285 = vsub.s32 0, %v284
    %v286 = vrot.slane %v281, %v285
    %v288 = vmul.f32 %v279, %v286
    %v289 = vmul.f32 %v280, %v286
    %v290 = vld [vmem:[#allocation6] sm:$0x1]
    %v292 = vlaneseq
    %v293 = vshrl.u32 %v292, 7
    %v294 = vsub.s32 0, %v293
    %v295 = vrot.slane %v290, %v294
    %v297 = vadd.f32 %v288, %v295
    %v298 = vadd.f32 %v289, %v295
    %v299 = vmul.f32 %v297, 0.5
    %v300 = vmul.f32 %v298, 0.5
    %v301 = vmul.f32 %v297, 0.70710677
    %v302 = vmul.f32 %v298, 0.70710677
    %v303 = verf.f32.pop %v301
    %v304 = verf.f32.pop %v302
    %v305 = vadd.f32 %v303, 1.0
    %v306 = vadd.f32 %v304, 1.0
    %v307 = vmul.f32 %v299, %v305
    %v308 = vmul.f32 %v300, %v306
    %v309 = vld [vmem:[%s5] sm:$0xff]
    %v310 = vld [vmem:[%s5 + $0x8] sm:$0xff]
    %v311 = vld [vmem:[%s5 + $0x10] sm:$0xff]
    %v312 = vld [vmem:[%s5 + $0x18] sm:$0xff]
    %v313 = vld [vmem:[#allocation8] sm:$0x1]
    %v315 = vlaneseq
    %v316 = vshrl.u32 %v315, 7
    %v317 = vsub.s32 0, %v316
    %v318 = vrot.slane %v313, %v317
    %v321 = vsel %vm253, %v307, 0
    %v324 = vsel %vm253, %v308, 0
    %326 = vmatprep.subr.mxu0 0.0
    %327 = vmatpush1.msra.mxu0 %v309
    %328 = vmatprep.subr.mxu0 0.0
    %329 = vmatpush1.msra.mxu0 %v310
    %330 = vmatprep.subr.mxu0 0.0
    %331 = vmatpush1.msra.mxu0 %v311
    %332 = vmatprep.subr.mxu0 0.0
    %333 = vmatpush1.msra.mxu0 %v312
    %334 = vmatprep.subr.mxu0 0.0
    %335 = vmatpush1.msra.mxu0 0.0
    %336 = vmatprep.subr.mxu0 0.0
    %337 = vmatpush1.msra.mxu0 0.0
    %338 = vmatprep.subr.mxu0 0.0
    %339 = vmatpush1.msra.mxu0 0.0
    %340 = vmatprep.subr.mxu0 0.0
    %341 = vmatpush1.msra.mxu0 0.0
    %342 = vmatprep.subr.mxu0 0.0
    %343 = vmatpush1.msra.mxu0 0.0
    %344 = vmatprep.subr.mxu0 0.0
    %345 = vmatpush1.msra.mxu0 0.0
    %346 = vmatprep.subr.mxu0 0.0
    %347 = vmatpush1.msra.mxu0 0.0
    %348 = vmatprep.subr.mxu0 0.0
    %349 = vmatpush1.msra.mxu0 0.0
    %350 = vmatprep.subr.mxu0 0.0
    %351 = vmatpush1.msra.mxu0 0.0
    %352 = vmatprep.subr.mxu0 0.0
    %353 = vmatpush1.msra.mxu0 0.0
    %354 = vmatprep.subr.mxu0 0.0
    %355 = vmatpush1.msra.mxu0 0.0
    %356 = vmatprep.subr.mxu0 0.0
    %357 = vmatpush1.msra.mxu0 0.0
    %358 = vmatprep.subr.mxu0 0.0
    %359 = vmatpush1.msra.mxu0 0.0
    %360 = vmatprep.subr.mxu0 0.0
    %361 = vmatpush1.msra.mxu0 0.0
    %362 = vmatprep.subr.mxu0 0.0
    %363 = vmatpush1.msra.mxu0 0.0
    %364 = vmatprep.subr.mxu0 0.0
    %365 = vmatpush1.msra.mxu0 0.0
    %366 = vmatprep.subr.mxu0 0.0
    %367 = vmatpush1.msra.mxu0 0.0
    %368 = vmatprep.subr.mxu0 0.0
    %369 = vmatpush1.msra.mxu0 0.0
    %370 = vmatprep.subr.mxu0 0.0
    %371 = vmatpush1.msra.mxu0 0.0
    %372 = vmatprep.subr.mxu0 0.0
    %373 = vmatpush1.msra.mxu0 0.0
    %374 = vmatprep.subr.mxu0 0.0
    %375 = vmatpush1.msra.mxu0 0.0
    %376 = vmatprep.subr.mxu0 0.0
    %377 = vmatpush1.msra.mxu0 0.0
    %378 = vmatprep.subr.mxu0 0.0
    %379 = vmatpush1.msra.mxu0 0.0
    %380 = vmatprep.subr.mxu0 0.0
    %381 = vmatpush1.msra.mxu0 0.0
    %382 = vmatprep.subr.mxu0 0.0
    %383 = vmatpush1.msra.mxu0 0.0
    %384 = vmatprep.subr.mxu0 0.0
    %385 = vmatpush1.msra.mxu0 0.0
    %386 = vmatprep.subr.mxu0 0.0
    %387 = vmatpush1.msra.mxu0 0.0
    %388 = vmatprep.subr.mxu0 0.0
    %389 = vmatpush1.msra.mxu0 0.0
    %390 = vmatprep.mubr.f32.mxu0 0.0
    %391 = vmatmul.mubr.f32.gmra.mrb[0].mxu0 %v321
    %v392 = vpop.f32.mrb[0].mxu0
    %v393 = vadd.f32 %v318, %v392
    %v394 = vpop.f32.mrb[0].mxu0
    %395 = vmatprep.mubr.f32.mxu0 0.0
    %396 = vmatmul.mubr.f32.gmra.mrb[0].mxu0 %v324
    %v397 = vpop.f32.mrb[0].mxu0
    %v398 = vadd.f32 %v318, %v397
    %v399 = vpop.f32.mrb[0].mxu0
    %400 = vdwg.mxu0
    %v401 = vsel %vm253, %v393, 0.0
    %402 = vadd.xlane.f32.xlu0 %v401
    %v403 = vpop.xlane.xlu0 %402
    %v404 = vsel %vm253, %v398, 0.0
    %405 = vadd.xlane.f32.xlu0 %v404
    %v406 = vpop.xlane.xlu0 %405
    %v407 = vmul.f32 %v403, %v260
    %v408 = vmul.f32 %v406, %v260
    %v409 = vsub.f32 %v393, %v407
    %v410 = vsub.f32 %v398, %v408
    %v411 = vmul.f32 %v409, %v409
    %v412 = vmul.f32 %v410, %v410
    %v413 = vsel %vm253, %v411, 0.0
    %414 = vadd.xlane.f32.xlu0 %v413
    %v415 = vpop.xlane.xlu0 %414
    %v416 = vsel %vm253, %v412, 0.0
    %417 = vadd.xlane.f32.xlu0 %v416
    %v418 = vpop.xlane.xlu0 %417
    %v419 = vmul.f32 %v415, %v260
    %v420 = vmul.f32 %v418, %v260
    %v421 = vadd.f32 %v419, 1e-05
    %v422 = vadd.f32 %v420, 1e-05
    %v423 = vrsqrt.pop %v421
    %v424 = vrsqrt.pop %v422
    %v425 = vmul.f32 %v409, %v423
    %v426 = vmul.f32 %v410, %v424
    %v427 = vld [vmem:[#allocation9] sm:$0x1]
    %v429 = vlaneseq
    %v430 = vshrl.u32 %v429, 7
    %v431 = vsub.s32 0, %v430
    %v432 = vrot.slane %v427, %v431
    %v434 = vmul.f32 %v425, %v432
    %v435 = vmul.f32 %v426, %v432
    %v436 = vld [vmem:[#allocation11] sm:$0x1]
    %v438 = vlaneseq
    %v439 = vshrl.u32 %v438, 7
    %v440 = vsub.s32 0, %v439
    %v441 = vrot.slane %v436, %v440
    %v443 = vadd.f32 %v434, %v441
    %v444 = vadd.f32 %v435, %v441
    %v445 = vmul.f32 %v443, 0.5
    %v446 = vmul.f32 %v444, 0.5
    %v447 = vmul.f32 %v443, 0.70710677
    %v448 = vmul.f32 %v444, 0.70710677
    %v449 = verf.f32.pop %v447
    %v450 = verf.f32.pop %v448
    %v451 = vadd.f32 %v449, 1.0
    %v452 = vadd.f32 %v450, 1.0
    %v453 = vmul.f32 %v445, %v451
    %v454 = vmul.f32 %v446, %v452
    %v455 = vld [vmem:[%s9] sm:$0xff]
    %v456 = vld [vmem:[%s9 + $0x8] sm:$0xff]
    %v457 = vld [vmem:[%s9 + $0x10] sm:$0xff]
    %v458 = vld [vmem:[%s9 + $0x18] sm:$0xff]
    %v459 = vld [vmem:[%s12] sm:$0x1]
    %v461 = vlaneseq
    %v462 = vshrl.u32 %v461, 7
    %v463 = vsub.s32 0, %v462
    %v464 = vrot.slane %v459, %v463
    %v467 = vsel %vm253, %v453, 0
    %v470 = vsel %vm253, %v454, 0
    %472 = vmatprep.subr.mxu0 0.0
    %473 = vmatpush1.msra.mxu0 %v455
    %474 = vmatprep.subr.mxu0 0.0
    %475 = vmatpush1.msra.mxu0 %v456
    %476 = vmatprep.subr.mxu0 0.0
    %477 = vmatpush1.msra.mxu0 %v457
    %478 = vmatprep.subr.mxu0 0.0
    %479 = vmatpush1.msra.mxu0 %v458
    %480 = vmatprep.subr.mxu0 0.0
    %481 = vmatpush1.msra.mxu0 0.0
    %482 = vmatprep.subr.mxu0 0.0
    %483 = vmatpush1.msra.mxu0 0.0
    %484 = vmatprep.subr.mxu0 0.0
    %485 = vmatpush1.msra.mxu0 0.0
    %486 = vmatprep.subr.mxu0 0.0
    %487 = vmatpush1.msra.mxu0 0.0
    %488 = vmatprep.subr.mxu0 0.0
    %489 = vmatpush1.msra.mxu0 0.0
    %490 = vmatprep.subr.mxu0 0.0
    %491 = vmatpush1.msra.mxu0 0.0
    %492 = vmatprep.subr.mxu0 0.0
    %493 = vmatpush1.msra.mxu0 0.0
    %494 = vmatprep.subr.mxu0 0.0
    %495 = vmatpush1.msra.mxu0 0.0
    %496 = vmatprep.subr.mxu0 0.0
    %497 = vmatpush1.msra.mxu0 0.0
    %498 = vmatprep.subr.mxu0 0.0
    %499 = vmatpush1.msra.mxu0 0.0
    %500 = vmatprep.subr.mxu0 0.0
    %501 = vmatpush1.msra.mxu0 0.0
    %502 = vmatprep.subr.mxu0 0.0
    %503 = vmatpush1.msra.mxu0 0.0
    %504 = vmatprep.subr.mxu0 0.0
    %505 = vmatpush1.msra.mxu0 0.0
    %506 = vmatprep.subr.mxu0 0.0
    %507 = vmatpush1.msra.mxu0 0.0
    %508 = vmatprep.subr.mxu0 0.0
    %509 = vmatpush1.msra.mxu0 0.0
    %510 = vmatprep.subr.mxu0 0.0
    %511 = vmatpush1.msra.mxu0 0.0
    %512 = vmatprep.subr.mxu0 0.0
    %513 = vmatpush1.msra.mxu0 0.0
    %514 = vmatprep.subr.mxu0 0.0
    %515 = vmatpush1.msra.mxu0 0.0
    %516 = vmatprep.subr.mxu0 0.0
    %517 = vmatpush1.msra.mxu0 0.0
    %518 = vmatprep.subr.mxu0 0.0
    %519 = vmatpush1.msra.mxu0 0.0
    %520 = vmatprep.subr.mxu0 0.0
    %521 = vmatpush1.msra.mxu0 0.0
    %522 = vmatprep.subr.mxu0 0.0
    %523 = vmatpush1.msra.mxu0 0.0
    %524 = vmatprep.subr.mxu0 0.0
    %525 = vmatpush1.msra.mxu0 0.0
    %526 = vmatprep.subr.mxu0 0.0
    %527 = vmatpush1.msra.mxu0 0.0
    %528 = vmatprep.subr.mxu0 0.0
    %529 = vmatpush1.msra.mxu0 0.0
    %530 = vmatprep.subr.mxu0 0.0
    %531 = vmatpush1.msra.mxu0 0.0
    %532 = vmatprep.subr.mxu0 0.0
    %533 = vmatpush1.msra.mxu0 0.0
    %534 = vmatprep.subr.mxu0 0.0
    %535 = vmatpush1.msra.mxu0 0.0
    %536 = vmatprep.mubr.f32.mxu0 0.0
    %537 = vmatmul.mubr.f32.gmra.mrb[0].mxu0 %v467
    %v538 = vpop.f32.mrb[0].mxu0
    %v539 = vadd.f32 %v464, %v538
    %v540 = vpop.f32.mrb[0].mxu0
    %541 = vmatprep.mubr.f32.mxu0 0.0
    %542 = vmatmul.mubr.f32.gmra.mrb[0].mxu0 %v470
    %v543 = vpop.f32.mrb[0].mxu0
    %v544 = vadd.f32 %v464, %v543
    %v545 = vpop.f32.mrb[0].mxu0
    %546 = vdwg.mxu0
    %v547 = vld [vmem:[#allocation12] sm:$0xff]
    %v548 = vld [vmem:[#allocation12 + $0x8] sm:$0xff]
    %v549 = vld [vmem:[#allocation12 + $0x10] sm:$0xff]
    %v550 = vld [vmem:[#allocation12 + $0x18] sm:$0xff]
    %v551 = vld [vmem:[%s13] sm:$0x1]
    %v553 = vlaneseq
    %v554 = vshrl.u32 %v553, 7
    %v555 = vsub.s32 0, %v554
    %v556 = vrot.slane %v551, %v555
    %558 = vmatprep.subr.mxu0 0.0
    %559 = vmatpush1.msra.mxu0 %v547
    %560 = vmatprep.subr.mxu0 0.0
    %561 = vmatpush1.msra.mxu0 %v548
    %562 = vmatprep.subr.mxu0 0.0
    %563 = vmatpush1.msra.mxu0 %v549
    %564 = vmatprep.subr.mxu0 0.0
    %565 = vmatpush1.msra.mxu0 %v550
    %566 = vmatprep.subr.mxu0 0.0
    %567 = vmatpush1.msra.mxu0 0.0
    %568 = vmatprep.subr.mxu0 0.0
    %569 = vmatpush1.msra.mxu0 0.0
    %570 = vmatprep.subr.mxu0 0.0
    %571 = vmatpush1.msra.mxu0 0.0
    %572 = vmatprep.subr.mxu0 0.0
    %573 = vmatpush1.msra.mxu0 0.0
    %574 = vmatprep.subr.mxu0 0.0
    %575 = vmatpush1.msra.mxu0 0.0
    %576 = vmatprep.subr.mxu0 0.0
    %577 = vmatpush1.msra.mxu0 0.0
    %578 = vmatprep.subr.mxu0 0.0
    %579 = vmatpush1.msra.mxu0 0.0
    %580 = vmatprep.subr.mxu0 0.0
    %581 = vmatpush1.msra.mxu0 0.0
    %582 = vmatprep.subr.mxu0 0.0
    %583 = vmatpush1.msra.mxu0 0.0
    %584 = vmatprep.subr.mxu0 0.0
    %585 = vmatpush1.msra.mxu0 0.0
    %586 = vmatprep.subr.mxu0 0.0
    %587 = vmatpush1.msra.mxu0 0.0
    %588 = vmatprep.subr.mxu0 0.0
    %589 = vmatpush1.msra.mxu0 0.0
    %590 = vmatprep.subr.mxu0 0.0
    %591 = vmatpush1.msra.mxu0 0.0
    %592 = vmatprep.subr.mxu0 0.0
    %593 = vmatpush1.msra.mxu0 0.0
    %594 = vmatprep.subr.mxu0 0.0
    %595 = vmatpush1.msra.mxu0 0.0
    %596 = vmatprep.subr.mxu0 0.0
    %597 = vmatpush1.msra.mxu0 0.0
    %598 = vmatprep.subr.mxu0 0.0
    %599 = vmatpush1.msra.mxu0 0.0
    %600 = vmatprep.subr.mxu0 0.0
    %601 = vmatpush1.msra.mxu0 0.0
    %602 = vmatprep.subr.mxu0 0.0
    %603 = vmatpush1.msra.mxu0 0.0
    %604 = vmatprep.subr.mxu0 0.0
    %605 = vmatpush1.msra.mxu0 0.0
    %606 = vmatprep.subr.mxu0 0.0
    %607 = vmatpush1.msra.mxu0 0.0
    %608 = vmatprep.subr.mxu0 0.0
    %609 = vmatpush1.msra.mxu0 0.0
    %610 = vmatprep.subr.mxu0 0.0
    %611 = vmatpush1.msra.mxu0 0.0
    %612 = vmatprep.subr.mxu0 0.0
    %613 = vmatpush1.msra.mxu0 0.0
    %614 = vmatprep.subr.mxu0 0.0
    %615 = vmatpush1.msra.mxu0 0.0
    %616 = vmatprep.subr.mxu0 0.0
    %617 = vmatpush1.msra.mxu0 0.0
    %618 = vmatprep.subr.mxu0 0.0
    %619 = vmatpush1.msra.mxu0 0.0
    %620 = vmatprep.subr.mxu0 0.0
    %621 = vmatpush1.msra.mxu0 0.0
    %622 = vmatprep.mubr.f32.mxu0 0.0
    %623 = vmatmul.mubr.f32.gmra.mrb[0].mxu0 %v467
    %v624 = vpop.f32.mrb[0].mxu0
    %v625 = vadd.f32 %v556, %v624
    %v626 = vpop.f32.mrb[0].mxu0
    %627 = vmatprep.mubr.f32.mxu0 0.0
    %628 = vmatmul.mubr.f32.gmra.mrb[0].mxu0 %v470
    %v629 = vpop.f32.mrb[0].mxu0
    %v630 = vadd.f32 %v556, %v629
    %v631 = vpop.f32.mrb[0].mxu0
    %632 = vdwg.mxu0
    %v633 = vld [vmem:[#allocation14] sm:$0xff]
    %v634 = vld [vmem:[#allocation14 + $0x8] sm:$0xff]
    %v635 = vld [vmem:[#allocation14 + $0x10] sm:$0xff]
    %v636 = vld [vmem:[#allocation14 + $0x18] sm:$0xff]
    %v637 = vld [vmem:[%s14] sm:$0x1]
    %v639 = vlaneseq
    %v640 = vshrl.u32 %v639, 7
    %v641 = vsub.s32 0, %v640
    %v642 = vrot.slane %v637, %v641
    %644 = vmatprep.subr.mxu0 0.0
    %645 = vmatpush1.msra.mxu0 %v633
    %646 = vmatprep.subr.mxu0 0.0
    %647 = vmatpush1.msra.mxu0 %v634
    %648 = vmatprep.subr.mxu0 0.0
    %649 = vmatpush1.msra.mxu0 %v635
    %650 = vmatprep.subr.mxu0 0.0
    %651 = vmatpush1.msra.mxu0 %v636
    %652 = vmatprep.subr.mxu0 0.0
    %653 = vmatpush1.msra.mxu0 0.0
    %654 = vmatprep.subr.mxu0 0.0
    %655 = vmatpush1.msra.mxu0 0.0
    %656 = vmatprep.subr.mxu0 0.0
    %657 = vmatpush1.msra.mxu0 0.0
    %658 = vmatprep.subr.mxu0 0.0
    %659 = vmatpush1.msra.mxu0 0.0
    %660 = vmatprep.subr.mxu0 0.0
    %661 = vmatpush1.msra.mxu0 0.0
    %662 = vmatprep.subr.mxu0 0.0
    %663 = vmatpush1.msra.mxu0 0.0
    %664 = vmatprep.subr.mxu0 0.0
    %665 = vmatpush1.msra.mxu0 0.0
    %666 = vmatprep.subr.mxu0 0.0
    %667 = vmatpush1.msra.mxu0 0.0
    %668 = vmatprep.subr.mxu0 0.0
    %669 = vmatpush1.msra.mxu0 0.0
    %670 = vmatprep.subr.mxu0 0.0
    %671 = vmatpush1.msra.mxu0 0.0
    %672 = vmatprep.subr.mxu0 0.0
    %673 = vmatpush1.msra.mxu0 0.0
    %674 = vmatprep.subr.mxu0 0.0
    %675 = vmatpush1.msra.mxu0 0.0
    %676 = vmatprep.subr.mxu0 0.0
    %677 = vmatpush1.msra.mxu0 0.0
    %678 = vmatprep.subr.mxu0 0.0
    %679 = vmatpush1.msra.mxu0 0.0
    %680 = vmatprep.subr.mxu0 0.0
    %681 = vmatpush1.msra.mxu0 0.0
    %682 = vmatprep.subr.mxu0 0.0
    %683 = vmatpush1.msra.mxu0 0.0
    %684 = vmatprep.subr.mxu0 0.0
    %685 = vmatpush1.msra.mxu0 0.0
    %686 = vmatprep.subr.mxu0 0.0
    %687 = vmatpush1.msra.mxu0 0.0
    %688 = vmatprep.subr.mxu0 0.0
    %689 = vmatpush1.msra.mxu0 0.0
    %690 = vmatprep.subr.mxu0 0.0
    %691 = vmatpush1.msra.mxu0 0.0
    %692 = vmatprep.subr.mxu0 0.0
    %693 = vmatpush1.msra.mxu0 0.0
    %694 = vmatprep.subr.mxu0 0.0
    %695 = vmatpush1.msra.mxu0 0.0
    %696 = vmatprep.subr.mxu0 0.0
    %697 = vmatpush1.msra.mxu0 0.0
    %698 = vmatprep.subr.mxu0 0.0
    %699 = vmatpush1.msra.mxu0 0.0
    %700 = vmatprep.subr.mxu0 0.0
    %701 = vmatpush1.msra.mxu0 0.0
    %702 = vmatprep.subr.mxu0 0.0
    %703 = vmatpush1.msra.mxu0 0.0
    %704 = vmatprep.subr.mxu0 0.0
    %705 = vmatpush1.msra.mxu0 0.0
    %706 = vmatprep.subr.mxu0 0.0
    %707 = vmatpush1.msra.mxu0 0.0
    %708 = vmatprep.mubr.f32.mxu0 0.0
    %709 = vmatmul.mubr.f32.gmra.mrb[0].mxu0 %v467
    %v710 = vpop.f32.mrb[0].mxu0
    %v711 = vadd.f32 %v642, %v710
    %v712 = vpop.f32.mrb[0].mxu0
    %713 = vmatprep.mubr.f32.mxu0 0.0
    %714 = vmatmul.mubr.f32.gmra.mrb[0].mxu0 %v470
    %v715 = vpop.f32.mrb[0].mxu0
    %v716 = vadd.f32 %v642, %v715
    %v717 = vpop.f32.mrb[0].mxu0
    %718 = vdwg.mxu0
    %vm719 = vcmask 64512
    %v721 = vsel %vm719, %v539, 0
    %v724 = vsel %vm719, %v625, 0
    %726 = vmatprep.subr.mxu0 0.0
    %727 = vmatpush1.xpose.msra.mxu0 %v724
    %728 = vmatprep.subr.mxu0 0.0
    %729 = vmatpush1.xpose.msra.mxu0 0.0
    %730 = vmatprep.subr.mxu0 0.0
    %731 = vmatpush1.xpose.msra.mxu0 0.0
    %732 = vmatprep.subr.mxu0 0.0
    %733 = vmatpush1.xpose.msra.mxu0 0.0
    %734 = vmatprep.subr.mxu0 0.0
    %735 = vmatpush1.xpose.msra.mxu0 0.0
    %736 = vmatprep.subr.mxu0 0.0
    %737 = vmatpush1.xpose.msra.mxu0 0.0
    %738 = vmatprep.subr.mxu0 0.0
    %739 = vmatpush1.xpose.msra.mxu0 0.0
    %740 = vmatprep.subr.mxu0 0.0
    %741 = vmatpush1.xpose.msra.mxu0 0.0
    %742 = vmatprep.subr.mxu0 0.0
    %743 = vmatpush1.xpose.msra.mxu0 0.0
    %744 = vmatprep.subr.mxu0 0.0
    %745 = vmatpush1.xpose.msra.mxu0 0.0
    %746 = vmatprep.subr.mxu0 0.0
    %747 = vmatpush1.xpose.msra.mxu0 0.0
    %748 = vmatprep.subr.mxu0 0.0
    %749 = vmatpush1.xpose.msra.mxu0 0.0
    %750 = vmatprep.subr.mxu0 0.0
    %751 = vmatpush1.xpose.msra.mxu0 0.0
    %752 = vmatprep.subr.mxu0 0.0
    %753 = vmatpush1.xpose.msra.mxu0 0.0
    %754 = vmatprep.subr.mxu0 0.0
    %755 = vmatpush1.xpose.msra.mxu0 0.0
    %756 = vmatprep.subr.mxu0 0.0
    %757 = vmatpush1.xpose.msra.mxu0 0.0
    %758 = vmatprep.subr.mxu0 0.0
    %759 = vmatpush1.xpose.msra.mxu0 0.0
    %760 = vmatprep.subr.mxu0 0.0
    %761 = vmatpush1.xpose.msra.mxu0 0.0
    %762 = vmatprep.subr.mxu0 0.0
    %763 = vmatpush1.xpose.msra.mxu0 0.0
    %764 = vmatprep.subr.mxu0 0.0
    %765 = vmatpush1.xpose.msra.mxu0 0.0
    %766 = vmatprep.subr.mxu0 0.0
    %767 = vmatpush1.xpose.msra.mxu0 0.0
    %768 = vmatprep.subr.mxu0 0.0
    %769 = vmatpush1.xpose.msra.mxu0 0.0
    %770 = vmatprep.subr.mxu0 0.0
    %771 = vmatpush1.xpose.msra.mxu0 0.0
    %772 = vmatprep.subr.mxu0 0.0
    %773 = vmatpush1.xpose.msra.mxu0 0.0
    %774 = vmatprep.subr.mxu0 0.0
    %775 = vmatpush1.xpose.msra.mxu0 0.0
    %776 = vmatprep.subr.mxu0 0.0
    %777 = vmatpush1.xpose.msra.mxu0 0.0
    %778 = vmatprep.subr.mxu0 0.0
    %779 = vmatpush1.xpose.msra.mxu0 0.0
    %780 = vmatprep.subr.mxu0 0.0
    %781 = vmatpush1.xpose.msra.mxu0 0.0
    %782 = vmatprep.subr.mxu0 0.0
    %783 = vmatpush1.xpose.msra.mxu0 0.0
    %784 = vmatprep.subr.mxu0 0.0
    %785 = vmatpush1.xpose.msra.mxu0 0.0
    %786 = vmatprep.subr.mxu0 0.0
    %787 = vmatpush1.xpose.msra.mxu0 0.0
    %788 = vmatprep.subr.mxu0 0.0
    %789 = vmatpush1.xpose.msra.mxu0 0.0
    %790 = vmatprep.mubr.f32.mxu0 0.0
    %791 = vmatmul.mubr.f32.gmra.mrb[0].mxu0 %v721
    %v792 = vpop.f32.mrb[0].mxu0
    %v793 = vadd.f32 0.0, %v792
    %v794 = vpop.f32.mrb[0].mxu0
    %795 = vdwg.mxu0
    %v797 = vsel %vm719, %v544, 0
    %v800 = vsel %vm719, %v630, 0
    %802 = vmatprep.subr.mxu0 0.0
    %803 = vmatpush1.xpose.msra.mxu0 %v800
    %804 = vmatprep.subr.mxu0 0.0
    %805 = vmatpush1.xpose.msra.mxu0 0.0
    %806 = vmatprep.subr.mxu0 0.0
    %807 = vmatpush1.xpose.msra.mxu0 0.0
    %808 = vmatprep.subr.mxu0 0.0
    %809 = vmatpush1.xpose.msra.mxu0 0.0
    %810 = vmatprep.subr.mxu0 0.0
    %811 = vmatpush1.xpose.msra.mxu0 0.0
    %812 = vmatprep.subr.mxu0 0.0
    %813 = vmatpush1.xpose.msra.mxu0 0.0
    %814 = vmatprep.subr.mxu0 0.0
    %815 = vmatpush1.xpose.msra.mxu0 0.0
    %816 = vmatprep.subr.mxu0 0.0
    %817 = vmatpush1.xpose.msra.mxu0 0.0
    %818 = vmatprep.subr.mxu0 0.0
    %819 = vmatpush1.xpose.msra.mxu0 0.0
    %820 = vmatprep.subr.mxu0 0.0
    %821 = vmatpush1.xpose.msra.mxu0 0.0
    %822 = vmatprep.subr.mxu0 0.0
    %823 = vmatpush1.xpose.msra.mxu0 0.0
    %824 = vmatprep.subr.mxu0 0.0
    %825 = vmatpush1.xpose.msra.mxu0 0.0
    %826 = vmatprep.subr.mxu0 0.0
    %827 = vmatpush1.xpose.msra.mxu0 0.0
    %828 = vmatprep.subr.mxu0 0.0
    %829 = vmatpush1.xpose.msra.mxu0 0.0
    %830 = vmatprep.subr.mxu0 0.0
    %831 = vmatpush1.xpose.msra.mxu0 0.0
    %832 = vmatprep.subr.mxu0 0.0
    %833 = vmatpush1.xpose.msra.mxu0 0.0
    %834 = vmatprep.subr.mxu0 0.0
    %835 = vmatpush1.xpose.msra.mxu0 0.0
    %836 = vmatprep.subr.mxu0 0.0
    %837 = vmatpush1.xpose.msra.mxu0 0.0
    %838 = vmatprep.subr.mxu0 0.0
    %839 = vmatpush1.xpose.msra.mxu0 0.0
    %840 = vmatprep.subr.mxu0 0.0
    %841 = vmatpush1.xpose.msra.mxu0 0.0
    %842 = vmatprep.subr.mxu0 0.0
    %843 = vmatpush1.xpose.msra.mxu0 0.0
    %844 = vmatprep.subr.mxu0 0.0
    %845 = vmatpush1.xpose.msra.mxu0 0.0
    %846 = vmatprep.subr.mxu0 0.0
    %847 = vmatpush1.xpose.msra.mxu0 0.0
    %848 = vmatprep.subr.mxu0 0.0
    %849 = vmatpush1.xpose.msra.mxu0 0.0
    %850 = vmatprep.subr.mxu0 0.0
    %851 = vmatpush1.xpose.msra.mxu0 0.0
    %852 = vmatprep.subr.mxu0 0.0
    %853 = vmatpush1.xpose.msra.mxu0 0.0
    %854 = vmatprep.subr.mxu0 0.0
    %855 = vmatpush1.xpose.msra.mxu0 0.0
    %856 = vmatprep.subr.mxu0 0.0
    %857 = vmatpush1.xpose.msra.mxu0 0.0
    %858 = vmatprep.subr.mxu0 0.0
    %859 = vmatpush1.xpose.msra.mxu0 0.0
    %860 = vmatprep.subr.mxu0 0.0
    %861 = vmatpush1.xpose.msra.mxu0 0.0
    %862 = vmatprep.subr.mxu0 0.0
    %863 = vmatpush1.xpose.msra.mxu0 0.0
    %864 = vmatprep.subr.mxu0 0.0
    %865 = vmatpush1.xpose.msra.mxu0 0.0
    %866 = vmatprep.mubr.f32.mxu0 0.0
    %867 = vmatmul.mubr.f32.gmra.mrb[0].mxu0 %v797
    %v868 = vpop.f32.mrb[0].mxu0
    %v869 = vadd.f32 0.0, %v868
    %v870 = vpop.f32.mrb[0].mxu0
    %871 = vdwg.mxu0
    %v872 = vsel %vm719, %v793, -inf
    %873 = vmax.xlane.f32.xlu0 %v872
    %v874 = vpop.xlane.xlu0 %873
    %v875 = vsel %vm719, %v869, -inf
    %876 = vmax.xlane.f32.xlu0 %v875
    %v877 = vpop.xlane.xlu0 %876
    %v878 = vsub.f32 %v793, %v874
    %v879 = vsub.f32 %v869, %v877
    %v880 = vmul.f32 %v878, 1.442695
    %v881 = vpow.pop %v880
    %v882 = vmul.f32 %v879, 1.442695
    %v883 = vpow.pop %v882
    %v884 = vsel %vm719, %v881, 0.0
    %885 = vadd.xlane.f32.xlu0 %v884
    %v886 = vpop.xlane.xlu0 %885
    %v887 = vsel %vm719, %v883, 0.0
    %888 = vadd.xlane.f32.xlu0 %v887
    %v889 = vpop.xlane.xlu0 %888
    %v890 = vrcp.pop %v886
    %v891 = vmul.f32 %v881, %v890
    %v892 = vrcp.pop %v889
    %v893 = vmul.f32 %v883, %v892
    %v895 = vsel %vm719, %v891, 0
    %897 = vmatprep.subr.mxu0 0.0
    %898 = vmatpush1.msra.mxu0 %v711
    %899 = vmatprep.subr.mxu0 0.0
    %900 = vmatpush1.msra.mxu0 0.0
    %901 = vmatprep.subr.mxu0 0.0
    %902 = vmatpush1.msra.mxu0 0.0
    %903 = vmatprep.subr.mxu0 0.0
    %904 = vmatpush1.msra.mxu0 0.0
    %905 = vmatprep.subr.mxu0 0.0
    %906 = vmatpush1.msra.mxu0 0.0
    %907 = vmatprep.subr.mxu0 0.0
    %908 = vmatpush1.msra.mxu0 0.0
    %909 = vmatprep.subr.mxu0 0.0
    %910 = vmatpush1.msra.mxu0 0.0
    %911 = vmatprep.subr.mxu0 0.0
    %912 = vmatpush1.msra.mxu0 0.0
    %913 = vmatprep.subr.mxu0 0.0
    %914 = vmatpush1.msra.mxu0 0.0
    %915 = vmatprep.subr.mxu0 0.0
    %916 = vmatpush1.msra.mxu0 0.0
    %917 = vmatprep.subr.mxu0 0.0
    %918 = vmatpush1.msra.mxu0 0.0
    %919 = vmatprep.subr.mxu0 0.0
    %920 = vmatpush1.msra.mxu0 0.0
    %921 = vmatprep.subr.mxu0 0.0
    %922 = vmatpush1.msra.mxu0 0.0
    %923 = vmatprep.subr.mxu0 0.0
    %924 = vmatpush1.msra.mxu0 0.0
    %925 = vmatprep.subr.mxu0 0.0
    %926 = vmatpush1.msra.mxu0 0.0
    %927 = vmatprep.subr.mxu0 0.0
    %928 = vmatpush1.msra.mxu0 0.0
    %929 = vmatprep.subr.mxu0 0.0
    %930 = vmatpush1.msra.mxu0 0.0
    %931 = vmatprep.subr.mxu0 0.0
    %932 = vmatpush1.msra.mxu0 0.0
    %933 = vmatprep.subr.mxu0 0.0
    %934 = vmatpush1.msra.mxu0 0.0
    %935 = vmatprep.subr.mxu0 0.0
    %936 = vmatpush1.msra.mxu0 0.0
    %937 = vmatprep.subr.mxu0 0.0
    %938 = vmatpush1.msra.mxu0 0.0
    %939 = vmatprep.subr.mxu0 0.0
    %940 = vmatpush1.msra.mxu0 0.0
    %941 = vmatprep.subr.mxu0 0.0
    %942 = vmatpush1.msra.mxu0 0.0
    %943 = vmatprep.subr.mxu0 0.0
    %944 = vmatpush1.msra.mxu0 0.0
    %945 = vmatprep.subr.mxu0 0.0
    %946 = vmatpush1.msra.mxu0 0.0
    %947 = vmatprep.subr.mxu0 0.0
    %948 = vmatpush1.msra.mxu0 0.0
    %949 = vmatprep.subr.mxu0 0.0
    %950 = vmatpush1.msra.mxu0 0.0
    %951 = vmatprep.subr.mxu0 0.0
    %952 = vmatpush1.msra.mxu0 0.0
    %953 = vmatprep.subr.mxu0 0.0
    %954 = vmatpush1.msra.mxu0 0.0
    %955 = vmatprep.subr.mxu0 0.0
    %956 = vmatpush1.msra.mxu0 0.0
    %957 = vmatprep.subr.mxu0 0.0
    %958 = vmatpush1.msra.mxu0 0.0
    %959 = vmatprep.subr.mxu0 0.0
    %960 = vmatpush1.msra.mxu0 0.0
    %961 = vmatprep.mubr.f32.mxu0 0.0
    %962 = vmatmul.mubr.f32.gmra.mrb[0].mxu0 %v895
    %v963 = vpop.f32.mrb[0].mxu0
    %v964 = vadd.f32 0.0, %v963
    %v965 = vpop.f32.mrb[0].mxu0
    %966 = vdwg.mxu0
    %v968 = vsel %vm719, %v893, 0
    %970 = vmatprep.subr.mxu0 0.0
    %971 = vmatpush1.msra.mxu0 %v716
    %972 = vmatprep.subr.mxu0 0.0
    %973 = vmatpush1.msra.mxu0 0.0
    %974 = vmatprep.subr.mxu0 0.0
    %975 = vmatpush1.msra.mxu0 0.0
    %976 = vmatprep.subr.mxu0 0.0
    %977 = vmatpush1.msra.mxu0 0.0
    %978 = vmatprep.subr.mxu0 0.0
    %979 = vmatpush1.msra.mxu0 0.0
    %980 = vmatprep.subr.mxu0 0.0
    %981 = vmatpush1.msra.mxu0 0.0
    %982 = vmatprep.subr.mxu0 0.0
    %983 = vmatpush1.msra.mxu0 0.0
    %984 = vmatprep.subr.mxu0 0.0
    %985 = vmatpush1.msra.mxu0 0.0
    %986 = vmatprep.subr.mxu0 0.0
    %987 = vmatpush1.msra.mxu0 0.0
    %988 = vmatprep.subr.mxu0 0.0
    %989 = vmatpush1.msra.mxu0 0.0
    %990 = vmatprep.subr.mxu0 0.0
    %991 = vmatpush1.msra.mxu0 0.0
    %992 = vmatprep.subr.mxu0 0.0
    %993 = vmatpush1.msra.mxu0 0.0
    %994 = vmatprep.subr.mxu0 0.0
    %995 = vmatpush1.msra.mxu0 0.0
    %996 = vmatprep.subr.mxu0 0.0
    %997 = vmatpush1.msra.mxu0 0.0
    %998 = vmatprep.subr.mxu0 0.0
    %999 = vmatpush1.msra.mxu0 0.0
    %1000 = vmatprep.subr.mxu0 0.0
    %1001 = vmatpush1.msra.mxu0 0.0
    %1002 = vmatprep.subr.mxu0 0.0
    %1003 = vmatpush1.msra.mxu0 0.0
    %1004 = vmatprep.subr.mxu0 0.0
    %1005 = vmatpush1.msra.mxu0 0.0
    %1006 = vmatprep.subr.mxu0 0.0
    %1007 = vmatpush1.msra.mxu0 0.0
    %1008 = vmatprep.subr.mxu0 0.0
    %1009 = vmatpush1.msra.mxu0 0.0
    %1010 = vmatprep.subr.mxu0 0.0
    %1011 = vmatpush1.msra.mxu0 0.0
    %1012 = vmatprep.subr.mxu0 0.0
    %1013 = vmatpush1.msra.mxu0 0.0
    %1014 = vmatprep.subr.mxu0 0.0
    %1015 = vmatpush1.msra.mxu0 0.0
    %1016 = vmatprep.subr.mxu0 0.0
    %1017 = vmatpush1.msra.mxu0 0.0
    %1018 = vmatprep.subr.mxu0 0.0
    %1019 = vmatpush1.msra.mxu0 0.0
    %1020 = vmatprep.subr.mxu0 0.0
    %1021 = vmatpush1.msra.mxu0 0.0
    %1022 = vmatprep.subr.mxu0 0.0
    %1023 = vmatpush1.msra.mxu0 0.0
    %1024 = vmatprep.subr.mxu0 0.0
    %1025 = vmatpush1.msra.mxu0 0.0
    %1026 = vmatprep.subr.mxu0 0.0
    %1027 = vmatpush1.msra.mxu0 0.0
    %1028 = vmatprep.subr.mxu0 0.0
    %1029 = vmatpush1.msra.mxu0 0.0
    %1030 = vmatprep.subr.mxu0 0.0
    %1031 = vmatpush1.msra.mxu0 0.0
    %1032 = vmatprep.subr.mxu0 0.0
    %1033 = vmatpush1.msra.mxu0 0.0
    %1034 = vmatprep.mubr.f32.mxu0 0.0
    %1035 = vmatmul.mubr.f32.gmra.mrb[0].mxu0 %v968
    %v1036 = vpop.f32.mrb[0].mxu0
    %v1037 = vadd.f32 0.0, %v1036
    %v1038 = vpop.f32.mrb[0].mxu0
    %1039 = vdwg.mxu0
    %1040 = vst.msk [vmem:[#allocation2] sm:$0xff] %vm719, %v964
    %1041 = vst.msk [vmem:[#allocation2 + $0x8] sm:$0xff] %vm719, %v1037
    %1042 = vrot.lane.b32.xlu0 %v539, 120
    %v1043 = vpop.permute.xlu0 %1042
    %1044 = vrot.lane.b32.xlu0 %v625, 120
    %v1045 = vpop.permute.xlu0 %1044
    %v1046 = vsel %vm719, %v1043, 0
    %v1048 = vsel %vm719, %v1045, 0
    %1050 = vmatprep.subr.mxu0 0.0
    %1051 = vmatpush1.xpose.msra.mxu0 %v1048
    %1052 = vmatprep.subr.mxu0 0.0
    %1053 = vmatpush1.xpose.msra.mxu0 0.0
    %1054 = vmatprep.subr.mxu0 0.0
    %1055 = vmatpush1.xpose.msra.mxu0 0.0
    %1056 = vmatprep.subr.mxu0 0.0
    %1057 = vmatpush1.xpose.msra.mxu0 0.0
    %1058 = vmatprep.subr.mxu0 0.0
    %1059 = vmatpush1.xpose.msra.mxu0 0.0
    %1060 = vmatprep.subr.mxu0 0.0
    %1061 = vmatpush1.xpose.msra.mxu0 0.0
    %1062 = vmatprep.subr.mxu0 0.0
    %1063 = vmatpush1.xpose.msra.mxu0 0.0
    %1064 = vmatprep.subr.mxu0 0.0
    %1065 = vmatpush1.xpose.msra.mxu0 0.0
    %1066 = vmatprep.subr.mxu0 0.0
    %1067 = vmatpush1.xpose.msra.mxu0 0.0
    %1068 = vmatprep.subr.mxu0 0.0
    %1069 = vmatpush1.xpose.msra.mxu0 0.0
    %1070 = vmatprep.subr.mxu0 0.0
    %1071 = vmatpush1.xpose.msra.mxu0 0.0
    %1072 = vmatprep.subr.mxu0 0.0
    %1073 = vmatpush1.xpose.msra.mxu0 0.0
    %1074 = vmatprep.subr.mxu0 0.0
    %1075 = vmatpush1.xpose.msra.mxu0 0.0
    %1076 = vmatprep.subr.mxu0 0.0
    %1077 = vmatpush1.xpose.msra.mxu0 0.0
    %1078 = vmatprep.subr.mxu0 0.0
    %1079 = vmatpush1.xpose.msra.mxu0 0.0
    %1080 = vmatprep.subr.mxu0 0.0
    %1081 = vmatpush1.xpose.msra.mxu0 0.0
    %1082 = vmatprep.subr.mxu0 0.0
    %1083 = vmatpush1.xpose.msra.mxu0 0.0
    %1084 = vmatprep.subr.mxu0 0.0
    %1085 = vmatpush1.xpose.msra.mxu0 0.0
    %1086 = vmatprep.subr.mxu0 0.0
    %1087 = vmatpush1.xpose.msra.mxu0 0.0
    %1088 = vmatprep.subr.mxu0 0.0
    %1089 = vmatpush1.xpose.msra.mxu0 0.0
    %1090 = vmatprep.subr.mxu0 0.0
    %1091 = vmatpush1.xpose.msra.mxu0 0.0
    %1092 = vmatprep.subr.mxu0 0.0
    %1093 = vmatpush1.xpose.msra.mxu0 0.0
    %1094 = vmatprep.subr.mxu0 0.0
    %1095 = vmatpush1.xpose.msra.mxu0 0.0
    %1096 = vmatprep.subr.mxu0 0.0
    %1097 = vmatpush1.xpose.msra.mxu0 0.0
    %1098 = vmatprep.subr.mxu0 0.0
    %1099 = vmatpush1.xpose.msra.mxu0 0.0
    %1100 = vmatprep.subr.mxu0 0.0
    %1101 = vmatpush1.xpose.msra.mxu0 0.0
    %1102 = vmatprep.subr.mxu0 0.0
    %1103 = vmatpush1.xpose.msra.mxu0 0.0
    %1104 = vmatprep.subr.mxu0 0.0
    %1105 = vmatpush1.xpose.msra.mxu0 0.0
    %1106 = vmatprep.subr.mxu0 0.0
    %1107 = vmatpush1.xpose.msra.mxu0 0.0
    %1108 = vmatprep.subr.mxu0 0.0
    %1109 = vmatpush1.xpose.msra.mxu0 0.0
    %1110 = vmatprep.subr.mxu0 0.0
    %1111 = vmatpush1.xpose.msra.mxu0 0.0
    %1112 = vmatprep.subr.mxu0 0.0
    %1113 = vmatpush1.xpose.msra.mxu0 0.0
    %1114 = vmatprep.mubr.f32.mxu0 0.0
    %1115 = vmatmul.mubr.f32.gmra.mrb[0].mxu0 %v1046
    %v1116 = vpop.f32.mrb[0].mxu0
    %v1117 = vadd.f32 0.0, %v1116
    %v1118 = vpop.f32.mrb[0].mxu0
    %1119 = vdwg.mxu0
    %1120 = vrot.lane.b32.xlu0 %v544, 120
    %v1121 = vpop.permute.xlu0 %1120
    %1122 = vrot.lane.b32.xlu0 %v630, 120
    %v1123 = vpop.permute.xlu0 %1122
    %v1124 = vsel %vm719, %v1121, 0
    %v1126 = vsel %vm719, %v1123, 0
    %1128 = vmatprep.subr.mxu0 0.0
    %1129 = vmatpush1.xpose.msra.mxu0 %v1126
    %1130 = vmatprep.subr.mxu0 0.0
    %1131 = vmatpush1.xpose.msra.mxu0 0.0
    %1132 = vmatprep.subr.mxu0 0.0
    %1133 = vmatpush1.xpose.msra.mxu0 0.0
    %1134 = vmatprep.subr.mxu0 0.0
    %1135 = vmatpush1.xpose.msra.mxu0 0.0
    %1136 = vmatprep.subr.mxu0 0.0
    %1137 = vmatpush1.xpose.msra.mxu0 0.0
    %1138 = vmatprep.subr.mxu0 0.0
    %1139 = vmatpush1.xpose.msra.mxu0 0.0
    %1140 = vmatprep.subr.mxu0 0.0
    %1141 = vmatpush1.xpose.msra.mxu0 0.0
    %1142 = vmatprep.subr.mxu0 0.0
    %1143 = vmatpush1.xpose.msra.mxu0 0.0
    %1144 = vmatprep.subr.mxu0 0.0
    %1145 = vmatpush1.xpose.msra.mxu0 0.0
    %1146 = vmatprep.subr.mxu0 0.0
    %1147 = vmatpush1.xpose.msra.mxu0 0.0
    %1148 = vmatprep.subr.mxu0 0.0
    %1149 = vmatpush1.xpose.msra.mxu0 0.0
    %1150 = vmatprep.subr.mxu0 0.0
    %1151 = vmatpush1.xpose.msra.mxu0 0.0
    %1152 = vmatprep.subr.mxu0 0.0
    %1153 = vmatpush1.xpose.msra.mxu0 0.0
    %1154 = vmatprep.subr.mxu0 0.0
    %1155 = vmatpush1.xpose.msra.mxu0 0.0
    %1156 = vmatprep.subr.mxu0 0.0
    %1157 = vmatpush1.xpose.msra.mxu0 0.0
    %1158 = vmatprep.subr.mxu0 0.0
    %1159 = vmatpush1.xpose.msra.mxu0 0.0
    %1160 = vmatprep.subr.mxu0 0.0
    %1161 = vmatpush1.xpose.msra.mxu0 0.0
    %1162 = vmatprep.subr.mxu0 0.0
    %1163 = vmatpush1.xpose.msra.mxu0 0.0
    %1164 = vmatprep.subr.mxu0 0.0
    %1165 = vmatpush1.xpose.msra.mxu0 0.0
    %1166 = vmatprep.subr.mxu0 0.0
    %1167 = vmatpush1.xpose.msra.mxu0 0.0
    %1168 = vmatprep.subr.mxu0 0.0
    %1169 = vmatpush1.xpose.msra.mxu0 0.0
    %1170 = vmatprep.subr.mxu0 0.0
    %1171 = vmatpush1.xpose.msra.mxu0 0.0
    %1172 = vmatprep.subr.mxu0 0.0
    %1173 = vmatpush1.xpose.msra.mxu0 0.0
    %1174 = vmatprep.subr.mxu0 0.0
    %1175 = vmatpush1.xpose.msra.mxu0 0.0
    %1176 = vmatprep.subr.mxu0 0.0
    %1177 = vmatpush1.xpose.msra.mxu0 0.0
    %1178 = vmatprep.subr.mxu0 0.0
    %1179 = vmatpush1.xpose.msra.mxu0 0.0
    %1180 = vmatprep.subr.mxu0 0.0
    %1181 = vmatpush1.xpose.msra.mxu0 0.0
    %1182 = vmatprep.subr.mxu0 0.0
    %1183 = vmatpush1.xpose.msra.mxu0 0.0
    %1184 = vmatprep.subr.mxu0 0.0
    %1185 = vmatpush1.xpose.msra.mxu0 0.0
    %1186 = vmatprep.subr.mxu0 0.0
    %1187 = vmatpush1.xpose.msra.mxu0 0.0
    %1188 = vmatprep.subr.mxu0 0.0
    %1189 = vmatpush1.xpose.msra.mxu0 0.0
    %1190 = vmatprep.subr.mxu0 0.0
    %1191 = vmatpush1.xpose.msra.mxu0 0.0
    %1192 = vmatprep.mubr.f32.mxu0 0.0
    %1193 = vmatmul.mubr.f32.gmra.mrb[0].mxu0 %v1124
    %v1194 = vpop.f32.mrb[0].mxu0
    %v1195 = vadd.f32 0.0, %v1194
    %v1196 = vpop.f32.mrb[0].mxu0
    %1197 = vdwg.mxu0
    %v1198 = vsel %vm719, %v1117, -inf
    %1199 = vmax.xlane.f32.xlu0 %v1198
    %v1200 = vpop.xlane.xlu0 %1199
    %v1201 = vsel %vm719, %v1195, -inf
    %1202 = vmax.xlane.f32.xlu0 %v1201
    %v1203 = vpop.xlane.xlu0 %1202
    %v1204 = vsub.f32 %v1117, %v1200
    %v1205 = vsub.f32 %v1195, %v1203
    %v1206 = vmul.f32 %v1204, 1.442695
    %v1207 = vpow.pop %v1206
    %v1208 = vmul.f32 %v1205, 1.442695
    %v1209 = vpow.pop %v1208
    %v1210 = vsel %vm719, %v1207, 0.0
    %1211 = vadd.xlane.f32.xlu0 %v1210
    %v1212 = vpop.xlane.xlu0 %1211
    %v1213 = vsel %vm719, %v1209, 0.0
    %1214 = vadd.xlane.f32.xlu0 %v1213
    %v1215 = vpop.xlane.xlu0 %1214
    %v1216 = vrcp.pop %v1212
    %v1217 = vmul.f32 %v1207, %v1216
    %v1218 = vrcp.pop %v1215
    %v1219 = vmul.f32 %v1209, %v1218
    %1221 = vrot.lane.b32.xlu0 %v711, 120
    %v1222 = vpop.permute.xlu0 %1221
    %v1225 = vsel %vm719, %v1217, 0
    %1227 = vmatprep.subr.mxu0 0.0
    %1228 = vmatpush1.msra.mxu0 %v1222
    %1229 = vmatprep.subr.mxu0 0.0
    %1230 = vmatpush1.msra.mxu0 0.0
    %1231 = vmatprep.subr.mxu0 0.0
    %1232 = vmatpush1.msra.mxu0 0.0
    %1233 = vmatprep.subr.mxu0 0.0
    %1234 = vmatpush1.msra.mxu0 0.0
    %1235 = vmatprep.subr.mxu0 0.0
    %1236 = vmatpush1.msra.mxu0 0.0
    %1237 = vmatprep.subr.mxu0 0.0
    %1238 = vmatpush1.msra.mxu0 0.0
    %1239 = vmatprep.subr.mxu0 0.0
    %1240 = vmatpush1.msra.mxu0 0.0
    %1241 = vmatprep.subr.mxu0 0.0
    %1242 = vmatpush1.msra.mxu0 0.0
    %1243 = vmatprep.subr.mxu0 0.0
    %1244 = vmatpush1.msra.mxu0 0.0
    %1245 = vmatprep.subr.mxu0 0.0
    %1246 = vmatpush1.msra.mxu0 0.0
    %1247 = vmatprep.subr.mxu0 0.0
    %1248 = vmatpush1.msra.mxu0 0.0
    %1249 = vmatprep.subr.mxu0 0.0
    %1250 = vmatpush1.msra.mxu0 0.0
    %1251 = vmatprep.subr.mxu0 0.0
    %1252 = vmatpush1.msra.mxu0 0.0
    %1253 = vmatprep.subr.mxu0 0.0
    %1254 = vmatpush1.msra.mxu0 0.0
    %1255 = vmatprep.subr.mxu0 0.0
    %1256 = vmatpush1.msra.mxu0 0.0
    %1257 = vmatprep.subr.mxu0 0.0
    %1258 = vmatpush1.msra.mxu0 0.0
    %1259 = vmatprep.subr.mxu0 0.0
    %1260 = vmatpush1.msra.mxu0 0.0
    %1261 = vmatprep.subr.mxu0 0.0
    %1262 = vmatpush1.msra.mxu0 0.0
    %1263 = vmatprep.subr.mxu0 0.0
    %1264 = vmatpush1.msra.mxu0 0.0
    %1265 = vmatprep.subr.mxu0 0.0
    %1266 = vmatpush1.msra.mxu0 0.0
    %1267 = vmatprep.subr.mxu0 0.0
    %1268 = vmatpush1.msra.mxu0 0.0
    %1269 = vmatprep.subr.mxu0 0.0
    %1270 = vmatpush1.msra.mxu0 0.0
    %1271 = vmatprep.subr.mxu0 0.0
    %1272 = vmatpush1.msra.mxu0 0.0
    %1273 = vmatprep.subr.mxu0 0.0
    %1274 = vmatpush1.msra.mxu0 0.0
    %1275 = vmatprep.subr.mxu0 0.0
    %1276 = vmatpush1.msra.mxu0 0.0
    %1277 = vmatprep.subr.mxu0 0.0
    %1278 = vmatpush1.msra.mxu0 0.0
    %1279 = vmatprep.subr.mxu0 0.0
    %1280 = vmatpush1.msra.mxu0 0.0
    %1281 = vmatprep.subr.mxu0 0.0
    %1282 = vmatpush1.msra.mxu0 0.0
    %1283 = vmatprep.subr.mxu0 0.0
    %1284 = vmatpush1.msra.mxu0 0.0
    %1285 = vmatprep.subr.mxu0 0.0
    %1286 = vmatpush1.msra.mxu0 0.0
    %1287 = vmatprep.subr.mxu0 0.0
    %1288 = vmatpush1.msra.mxu0 0.0
    %1289 = vmatprep.subr.mxu0 0.0
    %1290 = vmatpush1.msra.mxu0 0.0
    %1291 = vmatprep.mubr.f32.mxu0 0.0
    %1292 = vmatmul.mubr.f32.gmra.mrb[0].mxu0 %v1225
    %v1293 = vpop.f32.mrb[0].mxu0
    %v1294 = vadd.f32 0.0, %v1293
    %v1295 = vpop.f32.mrb[0].mxu0
    %1296 = vdwg.mxu0
    %1298 = vrot.lane.b32.xlu0 %v716, 120
    %v1299 = vpop.permute.xlu0 %1298
    %v1302 = vsel %vm719, %v1219, 0
    %1304 = vmatprep.subr.mxu0 0.0
    %1305 = vmatpush1.msra.mxu0 %v1299
    %1306 = vmatprep.subr.mxu0 0.0
    %1307 = vmatpush1.msra.mxu0 0.0
    %1308 = vmatprep.subr.mxu0 0.0
    %1309 = vmatpush1.msra.mxu0 0.0
    %1310 = vmatprep.subr.mxu0 0.0
    %1311 = vmatpush1.msra.mxu0 0.0
    %1312 = vmatprep.subr.mxu0 0.0
    %1313 = vmatpush1.msra.mxu0 0.0
    %1314 = vmatprep.subr.mxu0 0.0
    %1315 = vmatpush1.msra.mxu0 0.0
    %1316 = vmatprep.subr.mxu0 0.0
    %1317 = vmatpush1.msra.mxu0 0.0
    %1318 = vmatprep.subr.mxu0 0.0
    %1319 = vmatpush1.msra.mxu0 0.0
    %1320 = vmatprep.subr.mxu0 0.0
    %1321 = vmatpush1.msra.mxu0 0.0
    %1322 = vmatprep.subr.mxu0 0.0
    %1323 = vmatpush1.msra.mxu0 0.0
    %1324 = vmatprep.subr.mxu0 0.0
    %1325 = vmatpush1.msra.mxu0 0.0
    %1326 = vmatprep.subr.mxu0 0.0
    %1327 = vmatpush1.msra.mxu0 0.0
    %1328 = vmatprep.subr.mxu0 0.0
    %1329 = vmatpush1.msra.mxu0 0.0
    %1330 = vmatprep.subr.mxu0 0.0
    %1331 = vmatpush1.msra.mxu0 0.0
    %1332 = vmatprep.subr.mxu0 0.0
    %1333 = vmatpush1.msra.mxu0 0.0
    %1334 = vmatprep.subr.mxu0 0.0
    %1335 = vmatpush1.msra.mxu0 0.0
    %1336 = vmatprep.subr.mxu0 0.0
    %1337 = vmatpush1.msra.mxu0 0.0
    %1338 = vmatprep.subr.mxu0 0.0
    %1339 = vmatpush1.msra.mxu0 0.0
    %1340 = vmatprep.subr.mxu0 0.0
    %1341 = vmatpush1.msra.mxu0 0.0
    %1342 = vmatprep.subr.mxu0 0.0
    %1343 = vmatpush1.msra.mxu0 0.0
    %1344 = vmatprep.subr.mxu0 0.0
    %1345 = vmatpush1.msra.mxu0 0.0
    %1346 = vmatprep.subr.mxu0 0.0
    %1347 = vmatpush1.msra.mxu0 0.0
    %1348 = vmatprep.subr.mxu0 0.0
    %1349 = vmatpush1.msra.mxu0 0.0
    %1350 = vmatprep.subr.mxu0 0.0
    %1351 = vmatpush1.msra.mxu0 0.0
    %1352 = vmatprep.subr.mxu0 0.0
    %1353 = vmatpush1.msra.mxu0 0.0
    %1354 = vmatprep.subr.mxu0 0.0
    %1355 = vmatpush1.msra.mxu0 0.0
    %1356 = vmatprep.subr.mxu0 0.0
    %1357 = vmatpush1.msra.mxu0 0.0
    %1358 = vmatprep.subr.mxu0 0.0
    %1359 = vmatpush1.msra.mxu0 0.0
    %1360 = vmatprep.subr.mxu0 0.0
    %1361 = vmatpush1.msra.mxu0 0.0
    %1362 = vmatprep.subr.mxu0 0.0
    %1363 = vmatpush1.msra.mxu0 0.0
    %1364 = vmatprep.subr.mxu0 0.0
    %1365 = vmatpush1.msra.mxu0 0.0
    %1366 = vmatprep.subr.mxu0 0.0
    %1367 = vmatpush1.msra.mxu0 0.0
    %1368 = vmatprep.mubr.f32.mxu0 0.0
    %1369 = vmatmul.mubr.f32.gmra.mrb[0].mxu0 %v1302
    %v1370 = vpop.f32.mrb[0].mxu0
    %v1371 = vadd.f32 0.0, %v1370
    %v1372 = vpop.f32.mrb[0].mxu0
    %1373 = vdwg.mxu0
    %1376 = vrot.lane.b32.xlu0 %v1294, 8
    %v1377 = vpop.permute.xlu0 %1376
    %1378 = vrot.lane.b32.xlu0 %v1371, 8
    %v1379 = vpop.permute.xlu0 %1378
    %vm1382 = vcmask 130112
    %1383 = vst.msk [vmem:[#allocation2] sm:$0xff] %vm1382, %v1377
    %1384 = vst.msk [vmem:[#allocation2 + $0x8] sm:$0xff] %vm1382, %v1379
    %v1385 = vadd.f32 %v891, %v1217
    %v1386 = vadd.f32 %v893, %v1219
    %1387 = vrot.lane.b32.xlu0 %v539, 112
    %v1388 = vpop.permute.xlu0 %1387
    %1389 = vrot.lane.b32.xlu0 %v625, 112
    %v1390 = vpop.permute.xlu0 %1389
    %v1391 = vsel %vm719, %v1388, 0
    %v1393 = vsel %vm719, %v1390, 0
    %1395 = vmatprep.subr.mxu0 0.0
    %1396 = vmatpush1.xpose.msra.mxu0 %v1393
    %1397 = vmatprep.subr.mxu0 0.0
    %1398 = vmatpush1.xpose.msra.mxu0 0.0
    %1399 = vmatprep.subr.mxu0 0.0
    %1400 = vmatpush1.xpose.msra.mxu0 0.0
    %1401 = vmatprep.subr.mxu0 0.0
    %1402 = vmatpush1.xpose.msra.mxu0 0.0
    %1403 = vmatprep.subr.mxu0 0.0
    %1404 = vmatpush1.xpose.msra.mxu0 0.0
    %1405 = vmatprep.subr.mxu0 0.0
    %1406 = vmatpush1.xpose.msra.mxu0 0.0
    %1407 = vmatprep.subr.mxu0 0.0
    %1408 = vmatpush1.xpose.msra.mxu0 0.0
    %1409 = vmatprep.subr.mxu0 0.0
    %1410 = vmatpush1.xpose.msra.mxu0 0.0
    %1411 = vmatprep.subr.mxu0 0.0
    %1412 = vmatpush1.xpose.msra.mxu0 0.0
    %1413 = vmatprep.subr.mxu0 0.0
    %1414 = vmatpush1.xpose.msra.mxu0 0.0
    %1415 = vmatprep.subr.mxu0 0.0
    %1416 = vmatpush1.xpose.msra.mxu0 0.0
    %1417 = vmatprep.subr.mxu0 0.0
    %1418 = vmatpush1.xpose.msra.mxu0 0.0
    %1419 = vmatprep.subr.mxu0 0.0
    %1420 = vmatpush1.xpose.msra.mxu0 0.0
    %1421 = vmatprep.subr.mxu0 0.0
    %1422 = vmatpush1.xpose.msra.mxu0 0.0
    %1423 = vmatprep.subr.mxu0 0.0
    %1424 = vmatpush1.xpose.msra.mxu0 0.0
    %1425 = vmatprep.subr.mxu0 0.0
    %1426 = vmatpush1.xpose.msra.mxu0 0.0
    %1427 = vmatprep.subr.mxu0 0.0
    %1428 = vmatpush1.xpose.msra.mxu0 0.0
    %1429 = vmatprep.subr.mxu0 0.0
    %1430 = vmatpush1.xpose.msra.mxu0 0.0
    %1431 = vmatprep.subr.mxu0 0.0
    %1432 = vmatpush1.xpose.msra.mxu0 0.0
    %1433 = vmatprep.subr.mxu0 0.0
    %1434 = vmatpush1.xpose.msra.mxu0 0.0
    %1435 = vmatprep.subr.mxu0 0.0
    %1436 = vmatpush1.xpose.msra.mxu0 0.0
    %1437 = vmatprep.subr.mxu0 0.0
    %1438 = vmatpush1.xpose.msra.mxu0 0.0
    %1439 = vmatprep.subr.mxu0 0.0
    %1440 = vmatpush1.xpose.msra.mxu0 0.0
    %1441 = vmatprep.subr.mxu0 0.0
    %1442 = vmatpush1.xpose.msra.mxu0 0.0
    %1443 = vmatprep.subr.mxu0 0.0
    %1444 = vmatpush1.xpose.msra.mxu0 0.0
    %1445 = vmatprep.subr.mxu0 0.0
    %1446 = vmatpush1.xpose.msra.mxu0 0.0
    %1447 = vmatprep.subr.mxu0 0.0
    %1448 = vmatpush1.xpose.msra.mxu0 0.0
    %1449 = vmatprep.subr.mxu0 0.0
    %1450 = vmatpush1.xpose.msra.mxu0 0.0
    %1451 = vmatprep.subr.mxu0 0.0
    %1452 = vmatpush1.xpose.msra.mxu0 0.0
    %1453 = vmatprep.subr.mxu0 0.0
    %1454 = vmatpush1.xpose.msra.mxu0 0.0
    %1455 = vmatprep.subr.mxu0 0.0
    %1456 = vmatpush1.xpose.msra.mxu0 0.0
    %1457 = vmatprep.subr.mxu0 0.0
    %1458 = vmatpush1.xpose.msra.mxu0 0.0
    %1459 = vmatprep.mubr.f32.mxu0 0.0
    %1460 = vmatmul.mubr.f32.gmra.mrb[0].mxu0 %v1391
    %v1461 = vpop.f32.mrb[0].mxu0
    %v1462 = vadd.f32 0.0, %v1461
    %v1463 = vpop.f32.mrb[0].mxu0
    %1464 = vdwg.mxu0
    %1465 = vrot.lane.b32.xlu0 %v544, 112
    %v1466 = vpop.permute.xlu0 %1465
    %1467 = vrot.lane.b32.xlu0 %v630, 112
    %v1468 = vpop.permute.xlu0 %1467
    %v1469 = vsel %vm719, %v1466, 0
    %v1471 = vsel %vm719, %v1468, 0
    %1473 = vmatprep.subr.mxu0 0.0
    %1474 = vmatpush1.xpose.msra.mxu0 %v1471
    %1475 = vmatprep.subr.mxu0 0.0
    %1476 = vmatpush1.xpose.msra.mxu0 0.0
    %1477 = vmatprep.subr.mxu0 0.0
    %1478 = vmatpush1.xpose.msra.mxu0 0.0
    %1479 = vmatprep.subr.mxu0 0.0
    %1480 = vmatpush1.xpose.msra.mxu0 0.0
    %1481 = vmatprep.subr.mxu0 0.0
    %1482 = vmatpush1.xpose.msra.mxu0 0.0
    %1483 = vmatprep.subr.mxu0 0.0
    %1484 = vmatpush1.xpose.msra.mxu0 0.0
    %1485 = vmatprep.subr.mxu0 0.0
    %1486 = vmatpush1.xpose.msra.mxu0 0.0
    %1487 = vmatprep.subr.mxu0 0.0
    %1488 = vmatpush1.xpose.msra.mxu0 0.0
    %1489 = vmatprep.subr.mxu0 0.0
    %1490 = vmatpush1.xpose.msra.mxu0 0.0
    %1491 = vmatprep.subr.mxu0 0.0
    %1492 = vmatpush1.xpose.msra.mxu0 0.0
    %1493 = vmatprep.subr.mxu0 0.0
    %1494 = vmatpush1.xpose.msra.mxu0 0.0
    %1495 = vmatprep.subr.mxu0 0.0
    %1496 = vmatpush1.xpose.msra.mxu0 0.0
    %1497 = vmatprep.subr.mxu0 0.0
    %1498 = vmatpush1.xpose.msra.mxu0 0.0
    %1499 = vmatprep.subr.mxu0 0.0
    %1500 = vmatpush1.xpose.msra.mxu0 0.0
    %1501 = vmatprep.subr.mxu0 0.0
    %1502 = vmatpush1.xpose.msra.mxu0 0.0
    %1503 = vmatprep.subr.mxu0 0.0
    %1504 = vmatpush1.xpose.msra.mxu0 0.0
    %1505 = vmatprep.subr.mxu0 0.0
    %1506 = vmatpush1.xpose.msra.mxu0 0.0
    %1507 = vmatprep.subr.mxu0 0.0
    %1508 = vmatpush1.xpose.msra.mxu0 0.0
    %1509 = vmatprep.subr.mxu0 0.0
    %1510 = vmatpush1.xpose.msra.mxu0 0.0
    %1511 = vmatprep.subr.mxu0 0.0
    %1512 = vmatpush1.xpose.msra.mxu0 0.0
    %1513 = vmatprep.subr.mxu0 0.0
    %1514 = vmatpush1.xpose.msra.mxu0 0.0
    %1515 = vmatprep.subr.mxu0 0.0
    %1516 = vmatpush1.xpose.msra.mxu0 0.0
    %1517 = vmatprep.subr.mxu0 0.0
    %1518 = vmatpush1.xpose.msra.mxu0 0.0
    %1519 = vmatprep.subr.mxu0 0.0
    %1520 = vmatpush1.xpose.msra.mxu0 0.0
    %1521 = vmatprep.subr.mxu0 0.0
    %1522 = vmatpush1.xpose.msra.mxu0 0.0
    %1523 = vmatprep.subr.mxu0 0.0
    %1524 = vmatpush1.xpose.msra.mxu0 0.0
    %1525 = vmatprep.subr.mxu0 0.0
    %1526 = vmatpush1.xpose.msra.mxu0 0.0
    %1527 = vmatprep.subr.mxu0 0.0
    %1528 = vmatpush1.xpose.msra.mxu0 0.0
    %1529 = vmatprep.subr.mxu0 0.0
    %1530 = vmatpush1.xpose.msra.mxu0 0.0
    %1531 = vmatprep.subr.mxu0 0.0
    %1532 = vmatpush1.xpose.msra.mxu0 0.0
    %1533 = vmatprep.subr.mxu0 0.0
    %1534 = vmatpush1.xpose.msra.mxu0 0.0
    %1535 = vmatprep.subr.mxu0 0.0
    %1536 = vmatpush1.xpose.msra.mxu0 0.0
    %1537 = vmatprep.mubr.f32.mxu0 0.0
    %1538 = vmatmul.mubr.f32.gmra.mrb[0].mxu0 %v1469
    %v1539 = vpop.f32.mrb[0].mxu0
    %v1540 = vadd.f32 0.0, %v1539
    %v1541 = vpop.f32.mrb[0].mxu0
    %1542 = vdwg.mxu0
    %v1543 = vsel %vm719, %v1462, -inf
    %1544 = vmax.xlane.f32.xlu0 %v1543
    %v1545 = vpop.xlane.xlu0 %1544
    %v1546 = vsel %vm719, %v1540, -inf
    %1547 = vmax.xlane.f32.xlu0 %v1546
    %v1548 = vpop.xlane.xlu0 %1547
    %v1549 = vsub.f32 %v1462, %v1545
    %v1550 = vsub.f32 %v1540, %v1548
    %v1551 = vmul.f32 %v1549, 1.442695
    %v1552 = vpow.pop %v1551
    %v1553 = vmul.f32 %v1550, 1.442695
    %v1554 = vpow.pop %v1553
    %v1555 = vsel %vm719, %v1552, 0.0
    %1556 = vadd.xlane.f32.xlu0 %v1555
    %v1557 = vpop.xlane.xlu0 %1556
    %v1558 = vsel %vm719, %v1554, 0.0
    %1559 = vadd.xlane.f32.xlu0 %v1558
    %v1560 = vpop.xlane.xlu0 %1559
    %v1561 = vrcp.pop %v1557
    %v1562 = vmul.f32 %v1552, %v1561
    %v1563 = vrcp.pop %v1560
    %v1564 = vmul.f32 %v1554, %v1563
    %1565 = vrot.lane.b32.xlu0 %v711, 112
    %v1566 = vpop.permute.xlu0 %1565
    %v1569 = vsel %vm719, %v1562, 0
    %1571 = vmatprep.subr.mxu0 0.0
    %1572 = vmatpush1.msra.mxu0 %v1566
    %1573 = vmatprep.subr.mxu0 0.0
    %1574 = vmatpush1.msra.mxu0 0.0
    %1575 = vmatprep.subr.mxu0 0.0
    %1576 = vmatpush1.msra.mxu0 0.0
    %1577 = vmatprep.subr.mxu0 0.0
    %1578 = vmatpush1.msra.mxu0 0.0
    %1579 = vmatprep.subr.mxu0 0.0
    %1580 = vmatpush1.msra.mxu0 0.0
    %1581 = vmatprep.subr.mxu0 0.0
    %1582 = vmatpush1.msra.mxu0 0.0
    %1583 = vmatprep.subr.mxu0 0.0
    %1584 = vmatpush1.msra.mxu0 0.0
    %1585 = vmatprep.subr.mxu0 0.0
    %1586 = vmatpush1.msra.mxu0 0.0
    %1587 = vmatprep.subr.mxu0 0.0
    %1588 = vmatpush1.msra.mxu0 0.0
    %1589 = vmatprep.subr.mxu0 0.0
    %1590 = vmatpush1.msra.mxu0 0.0
    %1591 = vmatprep.subr.mxu0 0.0
    %1592 = vmatpush1.msra.mxu0 0.0
    %1593 = vmatprep.subr.mxu0 0.0
    %1594 = vmatpush1.msra.mxu0 0.0
    %1595 = vmatprep.subr.mxu0 0.0
    %1596 = vmatpush1.msra.mxu0 0.0
    %1597 = vmatprep.subr.mxu0 0.0
    %1598 = vmatpush1.msra.mxu0 0.0
    %1599 = vmatprep.subr.mxu0 0.0
    %1600 = vmatpush1.msra.mxu0 0.0
    %1601 = vmatprep.subr.mxu0 0.0
    %1602 = vmatpush1.msra.mxu0 0.0
    %1603 = vmatprep.subr.mxu0 0.0
    %1604 = vmatpush1.msra.mxu0 0.0
    %1605 = vmatprep.subr.mxu0 0.0
    %1606 = vmatpush1.msra.mxu0 0.0
    %1607 = vmatprep.subr.mxu0 0.0
    %1608 = vmatpush1.msra.mxu0 0.0
    %1609 = vmatprep.subr.mxu0 0.0
    %1610 = vmatpush1.msra.mxu0 0.0
    %1611 = vmatprep.subr.mxu0 0.0
    %1612 = vmatpush1.msra.mxu0 0.0
    %1613 = vmatprep.subr.mxu0 0.0
    %1614 = vmatpush1.msra.mxu0 0.0
    %1615 = vmatprep.subr.mxu0 0.0
    %1616 = vmatpush1.msra.mxu0 0.0
    %1617 = vmatprep.subr.mxu0 0.0
    %1618 = vmatpush1.msra.mxu0 0.0
    %1619 = vmatprep.subr.mxu0 0.0
    %1620 = vmatpush1.msra.mxu0 0.0
    %1621 = vmatprep.subr.mxu0 0.0
    %1622 = vmatpush1.msra.mxu0 0.0
    %1623 = vmatprep.subr.mxu0 0.0
    %1624 = vmatpush1.msra.mxu0 0.0
    %1625 = vmatprep.subr.mxu0 0.0
    %1626 = vmatpush1.msra.mxu0 0.0
    %1627 = vmatprep.subr.mxu0 0.0
    %1628 = vmatpush1.msra.mxu0 0.0
    %1629 = vmatprep.subr.mxu0 0.0
    %1630 = vmatpush1.msra.mxu0 0.0
    %1631 = vmatprep.subr.mxu0 0.0
    %1632 = vmatpush1.msra.mxu0 0.0
    %1633 = vmatprep.subr.mxu0 0.0
    %1634 = vmatpush1.msra.mxu0 0.0
    %1635 = vmatprep.mubr.f32.mxu0 0.0
    %1636 = vmatmul.mubr.f32.gmra.mrb[0].mxu0 %v1569
    %v1637 = vpop.f32.mrb[0].mxu0
    %v1638 = vadd.f32 0.0, %v1637
    %v1639 = vpop.f32.mrb[0].mxu0
    %1640 = vdwg.mxu0
    %1641 = vrot.lane.b32.xlu0 %v716, 112
    %v1642 = vpop.permute.xlu0 %1641
    %v1645 = vsel %vm719, %v1564, 0
    %1647 = vmatprep.subr.mxu0 0.0
    %1648 = vmatpush1.msra.mxu0 %v1642
    %1649 = vmatprep.subr.mxu0 0.0
    %1650 = vmatpush1.msra.mxu0 0.0
    %1651 = vmatprep.subr.mxu0 0.0
    %1652 = vmatpush1.msra.mxu0 0.0
    %1653 = vmatprep.subr.mxu0 0.0
    %1654 = vmatpush1.msra.mxu0 0.0
    %1655 = vmatprep.subr.mxu0 0.0
    %1656 = vmatpush1.msra.mxu0 0.0
    %1657 = vmatprep.subr.mxu0 0.0
    %1658 = vmatpush1.msra.mxu0 0.0
    %1659 = vmatprep.subr.mxu0 0.0
    %1660 = vmatpush1.msra.mxu0 0.0
    %1661 = vmatprep.subr.mxu0 0.0
    %1662 = vmatpush1.msra.mxu0 0.0
    %1663 = vmatprep.subr.mxu0 0.0
    %1664 = vmatpush1.msra.mxu0 0.0
    %1665 = vmatprep.subr.mxu0 0.0
    %1666 = vmatpush1.msra.mxu0 0.0
    %1667 = vmatprep.subr.mxu0 0.0
    %1668 = vmatpush1.msra.mxu0 0.0
    %1669 = vmatprep.subr.mxu0 0.0
    %1670 = vmatpush1.msra.mxu0 0.0
    %1671 = vmatprep.subr.mxu0 0.0
    %1672 = vmatpush1.msra.mxu0 0.0
    %1673 = vmatprep.subr.mxu0 0.0
    %1674 = vmatpush1.msra.mxu0 0.0
    %1675 = vmatprep.subr.mxu0 0.0
    %1676 = vmatpush1.msra.mxu0 0.0
    %1677 = vmatprep.subr.mxu0 0.0
    %1678 = vmatpush1.msra.mxu0 0.0
    %1679 = vmatprep.subr.mxu0 0.0
    %1680 = vmatpush1.msra.mxu0 0.0
    %1681 = vmatprep.subr.mxu0 0.0
    %1682 = vmatpush1.msra.mxu0 0.0
    %1683 = vmatprep.subr.mxu0 0.0
    %1684 = vmatpush1.msra.mxu0 0.0
    %1685 = vmatprep.subr.mxu0 0.0
    %1686 = vmatpush1.msra.mxu0 0.0
    %1687 = vmatprep.subr.mxu0 0.0
    %1688 = vmatpush1.msra.mxu0 0.0
    %1689 = vmatprep.subr.mxu0 0.0
    %1690 = vmatpush1.msra.mxu0 0.0
    %1691 = vmatprep.subr.mxu0 0.0
    %1692 = vmatpush1.msra.mxu0 0.0
    %1693 = vmatprep.subr.mxu0 0.0
    %1694 = vmatpush1.msra.mxu0 0.0
    %1695 = vmatprep.subr.mxu0 0.0
    %1696 = vmatpush1.msra.mxu0 0.0
    %1697 = vmatprep.subr.mxu0 0.0
    %1698 = vmatpush1.msra.mxu0 0.0
    %1699 = vmatprep.subr.mxu0 0.0
    %1700 = vmatpush1.msra.mxu0 0.0
    %1701 = vmatprep.subr.mxu0 0.0
    %1702 = vmatpush1.msra.mxu0 0.0
    %1703 = vmatprep.subr.mxu0 0.0
    %1704 = vmatpush1.msra.mxu0 0.0
    %1705 = vmatprep.subr.mxu0 0.0
    %1706 = vmatpush1.msra.mxu0 0.0
    %1707 = vmatprep.subr.mxu0 0.0
    %1708 = vmatpush1.msra.mxu0 0.0
    %1709 = vmatprep.subr.mxu0 0.0
    %1710 = vmatpush1.msra.mxu0 0.0
    %1711 = vmatprep.mubr.f32.mxu0 0.0
    %1712 = vmatmul.mubr.f32.gmra.mrb[0].mxu0 %v1645
    %v1713 = vpop.f32.mrb[0].mxu0
    %v1714 = vadd.f32 0.0, %v1713
    %v1715 = vpop.f32.mrb[0].mxu0
    %1716 = vdwg.mxu0
    %1719 = vrot.lane.b32.xlu0 %v1638, 16
    %v1720 = vpop.permute.xlu0 %1719
    %1721 = vrot.lane.b32.xlu0 %v1714, 16
    %v1722 = vpop.permute.xlu0 %1721
    %vm1725 = vcmask 195712
    %1726 = vst.msk [vmem:[#allocation2] sm:$0xff] %vm1725, %v1720
    %1727 = vst.msk [vmem:[#allocation2 + $0x8] sm:$0xff] %vm1725, %v1722
    %v1728 = vadd.f32 %v1385, %v1562
    %v1729 = vadd.f32 %v1386, %v1564
    %1730 = vrot.lane.b32.xlu0 %v539, 104
    %v1731 = vpop.permute.xlu0 %1730
    %1732 = vrot.lane.b32.xlu0 %v625, 104
    %v1733 = vpop.permute.xlu0 %1732
    %v1734 = vsel %vm719, %v1731, 0
    %v1736 = vsel %vm719, %v1733, 0
    %1738 = vmatprep.subr.mxu0 0.0
    %1739 = vmatpush1.xpose.msra.mxu0 %v1736
    %1740 = vmatprep.subr.mxu0 0.0
    %1741 = vmatpush1.xpose.msra.mxu0 0.0
    %1742 = vmatprep.subr.mxu0 0.0
    %1743 = vmatpush1.xpose.msra.mxu0 0.0
    %1744 = vmatprep.subr.mxu0 0.0
    %1745 = vmatpush1.xpose.msra.mxu0 0.0
    %1746 = vmatprep.subr.mxu0 0.0
    %1747 = vmatpush1.xpose.msra.mxu0 0.0
    %1748 = vmatprep.subr.mxu0 0.0
    %1749 = vmatpush1.xpose.msra.mxu0 0.0
    %1750 = vmatprep.subr.mxu0 0.0
    %1751 = vmatpush1.xpose.msra.mxu0 0.0
    %1752 = vmatprep.subr.mxu0 0.0
    %1753 = vmatpush1.xpose.msra.mxu0 0.0
    %1754 = vmatprep.subr.mxu0 0.0
    %1755 = vmatpush1.xpose.msra.mxu0 0.0
    %1756 = vmatprep.subr.mxu0 0.0
    %1757 = vmatpush1.xpose.msra.mxu0 0.0
    %1758 = vmatprep.subr.mxu0 0.0
    %1759 = vmatpush1.xpose.msra.mxu0 0.0
    %1760 = vmatprep.subr.mxu0 0.0
    %1761 = vmatpush1.xpose.msra.mxu0 0.0
    %1762 = vmatprep.subr.mxu0 0.0
    %1763 = vmatpush1.xpose.msra.mxu0 0.0
    %1764 = vmatprep.subr.mxu0 0.0
    %1765 = vmatpush1.xpose.msra.mxu0 0.0
    %1766 = vmatprep.subr.mxu0 0.0
    %1767 = vmatpush1.xpose.msra.mxu0 0.0
    %1768 = vmatprep.subr.mxu0 0.0
    %1769 = vmatpush1.xpose.msra.mxu0 0.0
    %1770 = vmatprep.subr.mxu0 0.0
    %1771 = vmatpush1.xpose.msra.mxu0 0.0
    %1772 = vmatprep.subr.mxu0 0.0
    %1773 = vmatpush1.xpose.msra.mxu0 0.0
    %1774 = vmatprep.subr.mxu0 0.0
    %1775 = vmatpush1.xpose.msra.mxu0 0.0
    %1776 = vmatprep.subr.mxu0 0.0
    %1777 = vmatpush1.xpose.msra.mxu0 0.0
    %1778 = vmatprep.subr.mxu0 0.0
    %1779 = vmatpush1.xpose.msra.mxu0 0.0
    %1780 = vmatprep.subr.mxu0 0.0
    %1781 = vmatpush1.xpose.msra.mxu0 0.0
    %1782 = vmatprep.subr.mxu0 0.0
    %1783 = vmatpush1.xpose.msra.mxu0 0.0
    %1784 = vmatprep.subr.mxu0 0.0
    %1785 = vmatpush1.xpose.msra.mxu0 0.0
    %1786 = vmatprep.subr.mxu0 0.0
    %1787 = vmatpush1.xpose.msra.mxu0 0.0
    %1788 = vmatprep.subr.mxu0 0.0
    %1789 = vmatpush1.xpose.msra.mxu0 0.0
    %1790 = vmatprep.subr.mxu0 0.0
    %1791 = vmatpush1.xpose.msra.mxu0 0.0
    %1792 = vmatprep.subr.mxu0 0.0
    %1793 = vmatpush1.xpose.msra.mxu0 0.0
    %1794 = vmatprep.subr.mxu0 0.0
    %1795 = vmatpush1.xpose.msra.mxu0 0.0
    %1796 = vmatprep.subr.mxu0 0.0
    %1797 = vmatpush1.xpose.msra.mxu0 0.0
    %1798 = vmatprep.subr.mxu0 0.0
    %1799 = vmatpush1.xpose.msra.mxu0 0.0
    %1800 = vmatprep.subr.mxu0 0.0
    %1801 = vmatpush1.xpose.msra.mxu0 0.0
    %1802 = vmatprep.mubr.f32.mxu0 0.0
    %1803 = vmatmul.mubr.f32.gmra.mrb[0].mxu0 %v1734
    %v1804 = vpop.f32.mrb[0].mxu0
    %v1805 = vadd.f32 0.0, %v1804
    %v1806 = vpop.f32.mrb[0].mxu0
    %1807 = vdwg.mxu0
    %1808 = vrot.lane.b32.xlu0 %v544, 104
    %v1809 = vpop.permute.xlu0 %1808
    %1810 = vrot.lane.b32.xlu0 %v630, 104
    %v1811 = vpop.permute.xlu0 %1810
    %v1812 = vsel %vm719, %v1809, 0
    %v1814 = vsel %vm719, %v1811, 0
    %1816 = vmatprep.subr.mxu0 0.0
    %1817 = vmatpush1.xpose.msra.mxu0 %v1814
    %1818 = vmatprep.subr.mxu0 0.0
    %1819 = vmatpush1.xpose.msra.mxu0 0.0
    %1820 = vmatprep.subr.mxu0 0.0
    %1821 = vmatpush1.xpose.msra.mxu0 0.0
    %1822 = vmatprep.subr.mxu0 0.0
    %1823 = vmatpush1.xpose.msra.mxu0 0.0
    %1824 = vmatprep.subr.mxu0 0.0
    %1825 = vmatpush1.xpose.msra.mxu0 0.0
    %1826 = vmatprep.subr.mxu0 0.0
    %1827 = vmatpush1.xpose.msra.mxu0 0.0
    %1828 = vmatprep.subr.mxu0 0.0
    %1829 = vmatpush1.xpose.msra.mxu0 0.0
    %1830 = vmatprep.subr.mxu0 0.0
    %1831 = vmatpush1.xpose.msra.mxu0 0.0
    %1832 = vmatprep.subr.mxu0 0.0
    %1833 = vmatpush1.xpose.msra.mxu0 0.0
    %1834 = vmatprep.subr.mxu0 0.0
    %1835 = vmatpush1.xpose.msra.mxu0 0.0
    %1836 = vmatprep.subr.mxu0 0.0
    %1837 = vmatpush1.xpose.msra.mxu0 0.0
    %1838 = vmatprep.subr.mxu0 0.0
    %1839 = vmatpush1.xpose.msra.mxu0 0.0
    %1840 = vmatprep.subr.mxu0 0.0
    %1841 = vmatpush1.xpose.msra.mxu0 0.0
    %1842 = vmatprep.subr.mxu0 0.0
    %1843 = vmatpush1.xpose.msra.mxu0 0.0
    %1844 = vmatprep.subr.mxu0 0.0
    %1845 = vmatpush1.xpose.msra.mxu0 0.0
    %1846 = vmatprep.subr.mxu0 0.0
    %1847 = vmatpush1.xpose.msra.mxu0 0.0
    %1848 = vmatprep.subr.mxu0 0.0
    %1849 = vmatpush1.xpose.msra.mxu0 0.0
    %1850 = vmatprep.subr.mxu0 0.0
    %1851 = vmatpush1.xpose.msra.mxu0 0.0
    %1852 = vmatprep.subr.mxu0 0.0
    %1853 = vmatpush1.xpose.msra.mxu0 0.0
    %1854 = vmatprep.subr.mxu0 0.0
    %1855 = vmatpush1.xpose.msra.mxu0 0.0
    %1856 = vmatprep.subr.mxu0 0.0
    %1857 = vmatpush1.xpose.msra.mxu0 0.0
    %1858 = vmatprep.subr.mxu0 0.0
    %1859 = vmatpush1.xpose.msra.mxu0 0.0
    %1860 = vmatprep.subr.mxu0 0.0
    %1861 = vmatpush1.xpose.msra.mxu0 0.0
    %1862 = vmatprep.subr.mxu0 0.0
    %1863 = vmatpush1.xpose.msra.mxu0 0.0
    %1864 = vmatprep.subr.mxu0 0.0
    %1865 = vmatpush1.xpose.msra.mxu0 0.0
    %1866 = vmatprep.subr.mxu0 0.0
    %1867 = vmatpush1.xpose.msra.mxu0 0.0
    %1868 = vmatprep.subr.mxu0 0.0
    %1869 = vmatpush1.xpose.msra.mxu0 0.0
    %1870 = vmatprep.subr.mxu0 0.0
    %1871 = vmatpush1.xpose.msra.mxu0 0.0
    %1872 = vmatprep.subr.mxu0 0.0
    %1873 = vmatpush1.xpose.msra.mxu0 0.0
    %1874 = vmatprep.subr.mxu0 0.0
    %1875 = vmatpush1.xpose.msra.mxu0 0.0
    %1876 = vmatprep.subr.mxu0 0.0
    %1877 = vmatpush1.xpose.msra.mxu0 0.0
    %1878 = vmatprep.subr.mxu0 0.0
    %1879 = vmatpush1.xpose.msra.mxu0 0.0
    %1880 = vmatprep.mubr.f32.mxu0 0.0
    %1881 = vmatmul.mubr.f32.gmra.mrb[0].mxu0 %v1812
    %v1882 = vpop.f32.mrb[0].mxu0
    %v1883 = vadd.f32 0.0, %v1882
    %v1884 = vpop.f32.mrb[0].mxu0
    %1885 = vdwg.mxu0
    %v1886 = vsel %vm719, %v1805, -inf
    %1887 = vmax.xlane.f32.xlu0 %v1886
    %v1888 = vpop.xlane.xlu0 %1887
    %v1889 = vsel %vm719, %v1883, -inf
    %1890 = vmax.xlane.f32.xlu0 %v1889
    %v1891 = vpop.xlane.xlu0 %1890
    %v1892 = vsub.f32 %v1805, %v1888
    %v1893 = vsub.f32 %v1883, %v1891
    %v1894 = vmul.f32 %v1892, 1.442695
    %v1895 = vpow.pop %v1894
    %v1896 = vmul.f32 %v1893, 1.442695
    %v1897 = vpow.pop %v1896
    %v1898 = vsel %vm719, %v1895, 0.0
    %1899 = vadd.xlane.f32.xlu0 %v1898
    %v1900 = vpop.xlane.xlu0 %1899
    %v1901 = vsel %vm719, %v1897, 0.0
    %1902 = vadd.xlane.f32.xlu0 %v1901
    %v1903 = vpop.xlane.xlu0 %1902
    %v1904 = vrcp.pop %v1900
    %v1905 = vmul.f32 %v1895, %v1904
    %v1906 = vrcp.pop %v1903
    %v1907 = vmul.f32 %v1897, %v1906
    %1908 = vrot.lane.b32.xlu0 %v711, 104
    %v1909 = vpop.permute.xlu0 %1908
    %v1912 = vsel %vm719, %v1905, 0
    %1914 = vmatprep.subr.mxu0 0.0
    %1915 = vmatpush1.msra.mxu0 %v1909
    %1916 = vmatprep.subr.mxu0 0.0
    %1917 = vmatpush1.msra.mxu0 0.0
    %1918 = vmatprep.subr.mxu0 0.0
    %1919 = vmatpush1.msra.mxu0 0.0
    %1920 = vmatprep.subr.mxu0 0.0
    %1921 = vmatpush1.msra.mxu0 0.0
    %1922 = vmatprep.subr.mxu0 0.0
    %1923 = vmatpush1.msra.mxu0 0.0
    %1924 = vmatprep.subr.mxu0 0.0
    %1925 = vmatpush1.msra.mxu0 0.0
    %1926 = vmatprep.subr.mxu0 0.0
    %1927 = vmatpush1.msra.mxu0 0.0
    %1928 = vmatprep.subr.mxu0 0.0
    %1929 = vmatpush1.msra.mxu0 0.0
    %1930 = vmatprep.subr.mxu0 0.0
    %1931 = vmatpush1.msra.mxu0 0.0
    %1932 = vmatprep.subr.mxu0 0.0
    %1933 = vmatpush1.msra.mxu0 0.0
    %1934 = vmatprep.subr.mxu0 0.0
    %1935 = vmatpush1.msra.mxu0 0.0
    %1936 = vmatprep.subr.mxu0 0.0
    %1937 = vmatpush1.msra.mxu0 0.0
    %1938 = vmatprep.subr.mxu0 0.0
    %1939 = vmatpush1.msra.mxu0 0.0
    %1940 = vmatprep.subr.mxu0 0.0
    %1941 = vmatpush1.msra.mxu0 0.0
    %1942 = vmatprep.subr.mxu0 0.0
    %1943 = vmatpush1.msra.mxu0 0.0
    %1944 = vmatprep.subr.mxu0 0.0
    %1945 = vmatpush1.msra.mxu0 0.0
    %1946 = vmatprep.subr.mxu0 0.0
    %1947 = vmatpush1.msra.mxu0 0.0
    %1948 = vmatprep.subr.mxu0 0.0
    %1949 = vmatpush1.msra.mxu0 0.0
    %1950 = vmatprep.subr.mxu0 0.0
    %1951 = vmatpush1.msra.mxu0 0.0
    %1952 = vmatprep.subr.mxu0 0.0
    %1953 = vmatpush1.msra.mxu0 0.0
    %1954 = vmatprep.subr.mxu0 0.0
    %1955 = vmatpush1.msra.mxu0 0.0
    %1956 = vmatprep.subr.mxu0 0.0
    %1957 = vmatpush1.msra.mxu0 0.0
    %1958 = vmatprep.subr.mxu0 0.0
    %1959 = vmatpush1.msra.mxu0 0.0
    %1960 = vmatprep.subr.mxu0 0.0
    %1961 = vmatpush1.msra.mxu0 0.0
    %1962 = vmatprep.subr.mxu0 0.0
    %1963 = vmatpush1.msra.mxu0 0.0
    %1964 = vmatprep.subr.mxu0 0.0
    %1965 = vmatpush1.msra.mxu0 0.0
    %1966 = vmatprep.subr.mxu0 0.0
    %1967 = vmatpush1.msra.mxu0 0.0
    %1968 = vmatprep.subr.mxu0 0.0
    %1969 = vmatpush1.msra.mxu0 0.0
    %1970 = vmatprep.subr.mxu0 0.0
    %1971 = vmatpush1.msra.mxu0 0.0
    %1972 = vmatprep.subr.mxu0 0.0
    %1973 = vmatpush1.msra.mxu0 0.0
    %1974 = vmatprep.subr.mxu0 0.0
    %1975 = vmatpush1.msra.mxu0 0.0
    %1976 = vmatprep.subr.mxu0 0.0
    %1977 = vmatpush1.msra.mxu0 0.0
    %1978 = vmatprep.mubr.f32.mxu0 0.0
    %1979 = vmatmul.mubr.f32.gmra.mrb[0].mxu0 %v1912
    %v1980 = vpop.f32.mrb[0].mxu0
    %v1981 = vadd.f32 0.0, %v1980
    %v1982 = vpop.f32.mrb[0].mxu0
    %1983 = vdwg.mxu0
    %1984 = vrot.lane.b32.xlu0 %v716, 104
    %v1985 = vpop.permute.xlu0 %1984
    %v1988 = vsel %vm719, %v1907, 0
    %1990 = vmatprep.subr.mxu0 0.0
    %1991 = vmatpush1.msra.mxu0 %v1985
    %1992 = vmatprep.subr.mxu0 0.0
    %1993 = vmatpush1.msra.mxu0 0.0
    %1994 = vmatprep.subr.mxu0 0.0
    %1995 = vmatpush1.msra.mxu0 0.0
    %1996 = vmatprep.subr.mxu0 0.0
    %1997 = vmatpush1.msra.mxu0 0.0
    %1998 = vmatprep.subr.mxu0 0.0
    %1999 = vmatpush1.msra.mxu0 0.0
    %2000 = vmatprep.subr.mxu0 0.0
    %2001 = vmatpush1.msra.mxu0 0.0
    %2002 = vmatprep.subr.mxu0 0.0
    %2003 = vmatpush1.msra.mxu0 0.0
    %2004 = vmatprep.subr.mxu0 0.0
    %2005 = vmatpush1.msra.mxu0 0.0
    %2006 = vmatprep.subr.mxu0 0.0
    %2007 = vmatpush1.msra.mxu0 0.0
    %2008 = vmatprep.subr.mxu0 0.0
    %2009 = vmatpush1.msra.mxu0 0.0
    %2010 = vmatprep.subr.mxu0 0.0
    %2011 = vmatpush1.msra.mxu0 0.0
    %2012 = vmatprep.subr.mxu0 0.0
    %2013 = vmatpush1.msra.mxu0 0.0
    %2014 = vmatprep.subr.mxu0 0.0
    %2015 = vmatpush1.msra.mxu0 0.0
    %2016 = vmatprep.subr.mxu0 0.0
    %2017 = vmatpush1.msra.mxu0 0.0
    %2018 = vmatprep.subr.mxu0 0.0
    %2019 = vmatpush1.msra.mxu0 0.0
    %2020 = vmatprep.subr.mxu0 0.0
    %2021 = vmatpush1.msra.mxu0 0.0
    %2022 = vmatprep.subr.mxu0 0.0
    %2023 = vmatpush1.msra.mxu0 0.0
    %2024 = vmatprep.subr.mxu0 0.0
    %2025 = vmatpush1.msra.mxu0 0.0
    %2026 = vmatprep.subr.mxu0 0.0
    %2027 = vmatpush1.msra.mxu0 0.0
    %2028 = vmatprep.subr.mxu0 0.0
    %2029 = vmatpush1.msra.mxu0 0.0
    %2030 = vmatprep.subr.mxu0 0.0
    %2031 = vmatpush1.msra.mxu0 0.0
    %2032 = vmatprep.subr.mxu0 0.0
    %2033 = vmatpush1.msra.mxu0 0.0
    %2034 = vmatprep.subr.mxu0 0.0
    %2035 = vmatpush1.msra.mxu0 0.0
    %2036 = vmatprep.subr.mxu0 0.0
    %2037 = vmatpush1.msra.mxu0 0.0
    %2038 = vmatprep.subr.mxu0 0.0
    %2039 = vmatpush1.msra.mxu0 0.0
    %2040 = vmatprep.subr.mxu0 0.0
    %2041 = vmatpush1.msra.mxu0 0.0
    %2042 = vmatprep.subr.mxu0 0.0
    %2043 = vmatpush1.msra.mxu0 0.0
    %2044 = vmatprep.subr.mxu0 0.0
    %2045 = vmatpush1.msra.mxu0 0.0
    %2046 = vmatprep.subr.mxu0 0.0
    %2047 = vmatpush1.msra.mxu0 0.0
    %2048 = vmatprep.subr.mxu0 0.0
    %2049 = vmatpush1.msra.mxu0 0.0
    %2050 = vmatprep.subr.mxu0 0.0
    %2051 = vmatpush1.msra.mxu0 0.0
    %2052 = vmatprep.subr.mxu0 0.0
    %2053 = vmatpush1.msra.mxu0 0.0
    %2054 = vmatprep.mubr.f32.mxu0 0.0
    %2055 = vmatmul.mubr.f32.gmra.mrb[0].mxu0 %v1988
    %v2056 = vpop.f32.mrb[0].mxu0
    %v2057 = vadd.f32 0.0, %v2056
    %v2058 = vpop.f32.mrb[0].mxu0
    %2059 = vdwg.mxu0
    %2062 = vrot.lane.b32.xlu0 %v1981, 24
    %v2063 = vpop.permute.xlu0 %2062
    %2064 = vrot.lane.b32.xlu0 %v2057, 24
    %v2065 = vpop.permute.xlu0 %2064
    %vm2068 = vcmask 261312
    %2069 = vst.msk [vmem:[#allocation2] sm:$0xff] %vm2068, %v2063
    %2070 = vst.msk [vmem:[#allocation2 + $0x8] sm:$0xff] %vm2068, %v2065
    %v2071 = vadd.f32 %v1728, %v1905
    %v2072 = vadd.f32 %v1729, %v1907
    %v2073 = vld [vmem:[#allocation2] sm:$0xff]
    %v2074 = vld [vmem:[#allocation2 + $0x8] sm:$0xff]
    %v2075 = vld [vmem:[#allocation15] sm:$0xff]
    %v2076 = vld [vmem:[#allocation15 + $0x8] sm:$0xff]
    %v2077 = vld [vmem:[#allocation15 + $0x10] sm:$0xff]
    %v2078 = vld [vmem:[#allocation15 + $0x18] sm:$0xff]
    %v2079 = vld [vmem:[%s16] sm:$0x1]
    %v2081 = vlaneseq
    %v2082 = vshrl.u32 %v2081, 7
    %v2083 = vsub.s32 0, %v2082
    %v2084 = vrot.slane %v2079, %v2083
    %v2087 = vsel %vm253, %v2073, 0
    %v2090 = vsel %vm253, %v2074, 0
    %2092 = vmatprep.subr.mxu0 0.0
    %2093 = vmatpush1.msra.mxu0 %v2075
    %2094 = vmatprep.subr.mxu0 0.0
    %2095 = vmatpush1.msra.mxu0 %v2076
    %2096 = vmatprep.subr.mxu0 0.0
    %2097 = vmatpush1.msra.mxu0 %v2077
    %2098 = vmatprep.subr.mxu0 0.0
    %2099 = vmatpush1.msra.mxu0 %v2078
    %2100 = vmatprep.subr.mxu0 0.0
    %2101 = vmatpush1.msra.mxu0 0.0
    %2102 = vmatprep.subr.mxu0 0.0
    %2103 = vmatpush1.msra.mxu0 0.0
    %2104 = vmatprep.subr.mxu0 0.0
    %2105 = vmatpush1.msra.mxu0 0.0
    %2106 = vmatprep.subr.mxu0 0.0
    %2107 = vmatpush1.msra.mxu0 0.0
    %2108 = vmatprep.subr.mxu0 0.0
    %2109 = vmatpush1.msra.mxu0 0.0
    %2110 = vmatprep.subr.mxu0 0.0
    %2111 = vmatpush1.msra.mxu0 0.0
    %2112 = vmatprep.subr.mxu0 0.0
    %2113 = vmatpush1.msra.mxu0 0.0
    %2114 = vmatprep.subr.mxu0 0.0
    %2115 = vmatpush1.msra.mxu0 0.0
    %2116 = vmatprep.subr.mxu0 0.0
    %2117 = vmatpush1.msra.mxu0 0.0
    %2118 = vmatprep.subr.mxu0 0.0
    %2119 = vmatpush1.msra.mxu0 0.0
    %2120 = vmatprep.subr.mxu0 0.0
    %2121 = vmatpush1.msra.mxu0 0.0
    %2122 = vmatprep.subr.mxu0 0.0
    %2123 = vmatpush1.msra.mxu0 0.0
    %2124 = vmatprep.subr.mxu0 0.0
    %2125 = vmatpush1.msra.mxu0 0.0
    %2126 = vmatprep.subr.mxu0 0.0
    %2127 = vmatpush1.msra.mxu0 0.0
    %2128 = vmatprep.subr.mxu0 0.0
    %2129 = vmatpush1.msra.mxu0 0.0
    %2130 = vmatprep.subr.mxu0 0.0
    %2131 = vmatpush1.msra.mxu0 0.0
    %2132 = vmatprep.subr.mxu0 0.0
    %2133 = vmatpush1.msra.mxu0 0.0
    %2134 = vmatprep.subr.mxu0 0.0
    %2135 = vmatpush1.msra.mxu0 0.0
    %2136 = vmatprep.subr.mxu0 0.0
    %2137 = vmatpush1.msra.mxu0 0.0
    %2138 = vmatprep.subr.mxu0 0.0
    %2139 = vmatpush1.msra.mxu0 0.0
    %2140 = vmatprep.subr.mxu0 0.0
    %2141 = vmatpush1.msra.mxu0 0.0
    %2142 = vmatprep.subr.mxu0 0.0
    %2143 = vmatpush1.msra.mxu0 0.0
    %2144 = vmatprep.subr.mxu0 0.0
    %2145 = vmatpush1.msra.mxu0 0.0
    %2146 = vmatprep.subr.mxu0 0.0
    %2147 = vmatpush1.msra.mxu0 0.0
    %2148 = vmatprep.subr.mxu0 0.0
    %2149 = vmatpush1.msra.mxu0 0.0
    %2150 = vmatprep.subr.mxu0 0.0
    %2151 = vmatpush1.msra.mxu0 0.0
    %2152 = vmatprep.subr.mxu0 0.0
    %2153 = vmatpush1.msra.mxu0 0.0
    %2154 = vmatprep.subr.mxu0 0.0
    %2155 = vmatpush1.msra.mxu0 0.0
    %2156 = vmatprep.mubr.f32.mxu0 0.0
    %2157 = vmatmul.mubr.f32.gmra.mrb[0].mxu0 %v2087
    %v2158 = vpop.f32.mrb[0].mxu0
    %v2159 = vadd.f32 %v2084, %v2158
    %v2160 = vpop.f32.mrb[0].mxu0
    %2161 = vmatprep.mubr.f32.mxu0 0.0
    %2162 = vmatmul.mubr.f32.gmra.mrb[0].mxu0 %v2090
    %v2163 = vpop.f32.mrb[0].mxu0
    %v2164 = vadd.f32 %v2084, %v2163
    %v2165 = vpop.f32.mrb[0].mxu0
    %2166 = vdwg.mxu0
    %2167 = vst.msk [vmem:[%s17] sm:$0xff] %vm253, %v2159
    %2168 = vst.msk [vmem:[%s17 + $0x8] sm:$0xff] %vm253, %v2164
    %v2169 = vmul.f32 %v2071, 0.25
    %v2170 = vmul.f32 %v2072, 0.25
    %2171 = vst.msk [vmem:[#allocation17] sm:$0xff] %vm719, %v2169
    %2172 = vst.msk [vmem:[#allocation17 + $0x8] sm:$0xff] %vm719, %v2170
    // Predicated region
    $region102: #{deep_processor_forward.1} parent=1 // pred_check
      _
    $region103: #{deep_processor_forward.1} parent=1 // pred_check_branch
      %2174 = sbr.rel (0) target = $region105
    $region104: #{deep_processor_forward.1} parent=1 // pred_region
      _
    $region105: #{deep_processor_forward.1} parent=1 // pred_fallthru
      _
    // Predicated region
    $region106: #{deep_processor_forward.1} parent=1 // pred_check
      _
    $region107: #{deep_processor_forward.1} parent=1 // pred_check_branch
      %2176 = sbr.rel (0) target = $region109
    $region108: #{deep_processor_forward.1} parent=1 // pred_region
      %s2178 = ssub.s32 256, 256
      %2179 = vsyncadd [#allocation5], %s2178
      %s2180 = sshll.u32 [#allocation17], 4
      %s2181 = int_to_ptr.vmem [resolvable:$true] %s2180
      %2186 = dma.vmem_to_hbm [thread:$0]  %s2181, 256, %s18, [#allocation5], 128, 128, 8
    $region109: #{deep_processor_forward.1} parent=1 // pred_fallthru
      _
    // Predicated region
    $region110: #{deep_processor_forward.1} parent=1 // pred_check
      _
    $region111: #{deep_processor_forward.1} parent=1 // pred_check_branch
      %2188 = sbr.rel (0) target = $region113
    $region112: #{deep_processor_forward.1} parent=1 // pred_region
      _
    $region113: #{deep_processor_forward.1} parent=1 // pred_fallthru
      _
    // Predicated region
    $region114: #{deep_processor_forward.1} parent=1 // pred_check
      _
    $region115: #{deep_processor_forward.1} parent=1 // pred_check_branch
      %2190 = sbr.rel (0) target = $region117
    $region116: #{deep_processor_forward.1} parent=1 // pred_region
      %2191 = dma.done [#allocation5], 256
    $region117: #{deep_processor_forward.1} parent=1 // pred_fallthru
      _
    %2192 = vsyncpa [#allocation4], 1
    %2193 = vsyncpa [#allocation7], 1
    %2194 = vsyncpa [#allocation10], 1
    %2195 = vsyncpa [#allocation13], 1
    %2196 = vsyncpa [#allocation16], 1
    %2197 = vsyncpa [#allocation5], 1

</llo_original>
